<compile_context>
chip_gen: v7x
topology: tpu7x:2x2x1
jax: 0.10.0
libtpu: 0.0.40
codegen_flags: <defaults>
</compile_context>

<pallas_src>
import functools

import jax
import jax.numpy as jnp
from jax.experimental import pallas as pl
from jax.experimental.pallas import tpu as pltpu


def _round_up(n, m):
    return (n + m - 1) // m * m


def ffnet_kernel(x_ref, w1_ref, w2_ref, w3_ref, w4_ref, b_ref, o_ref, *,
                 epilogue_dtype):
    """Fused FFNet forward for one batch tile.

    h = relu(x @ W1 + b1)
    h = relu(h @ W2 + b2)      # dropout (p=0.4) -> identity in eval mode
    h = relu(h @ W3 + b3)
    out = h @ W4 + b4

    Matmuls run on the MXU in the weights' storage dtype (bf16) with f32
    accumulation; the bias/ReLU epilogue runs in `epilogue_dtype`
    (f32 on v5e, bf16 on v6e/v7x).
    """
    cd = w1_ref.dtype          # MXU operand dtype (bf16)
    ed = epilogue_dtype        # VPU epilogue dtype
    hid_p = w1_ref.shape[1]
    out_p = w4_ref.shape[1]

    b = b_ref[...]             # (4, max(hid_p, out_p)) f32, loaded once
    b1 = b[0:1, :hid_p].astype(ed)
    b2 = b[1:2, :hid_p].astype(ed)
    b3 = b[2:3, :hid_p].astype(ed)
    b4 = b[3:4, :out_p]        # final bias stays f32 (output is f32)

    x = x_ref[...].astype(cd)  # x arrives f32, cast to bf16 on the VPU here

    h = jnp.dot(x, w1_ref[...], preferred_element_type=jnp.float32)
    h = jnp.maximum(h.astype(ed) + b1, 0).astype(cd)

    h = jnp.dot(h, w2_ref[...], preferred_element_type=jnp.float32)
    h = jnp.maximum(h.astype(ed) + b2, 0).astype(cd)
    # TODO(synk): nn.Dropout(p=0.4) in training mode would need pltpu.prng_seed
    # + pltpu.stateful_bernoulli; eval-mode semantics (identity) are used here.

    h = jnp.dot(h, w3_ref[...], preferred_element_type=jnp.float32)
    h = jnp.maximum(h.astype(ed) + b3, 0).astype(cd)

    out = jnp.dot(h, w4_ref[...], preferred_element_type=jnp.float32)
    o_ref[...] = (out + b4).astype(o_ref.dtype)


def prepare_params(params, *, compute_dtype=jnp.bfloat16):
    """One-time padding + casting of the weights/biases (hoisted off the hot path).

    Weights are stored transposed (in_features, out_features).  Hidden/output
    feature axes are zero-padded to multiples of 128 (lane-dense); the input
    feature axis of w1 is left unpadded (it is the full-array contraction dim).
    Biases are stacked into a single (4, max(hid_p, out_p)) f32 array.
    """
    in_dim, hid = params["w1"].shape
    out_dim = params["w4"].shape[1]
    hid_p = _round_up(hid, 128)
    out_p = _round_up(out_dim, 128)
    bcols = max(hid_p, out_p)

    def padw(w, rows, cols):
        return jnp.pad(w, ((0, rows - w.shape[0]),
                           (0, cols - w.shape[1]))).astype(compute_dtype)

    def padb(bv, cols):
        bv = jnp.asarray(bv, jnp.float32).reshape(1, -1)
        return jnp.pad(bv, ((0, 0), (0, cols - bv.shape[1])))

    prepped = {
        "w1": padw(params["w1"], in_dim, hid_p),
        "w2": padw(params["w2"], hid_p, hid_p),
        "w3": padw(params["w3"], hid_p, hid_p),
        "w4": padw(params["w4"], hid_p, out_p),
        "b": jnp.concatenate([padb(params["b1"], bcols),
                              padb(params["b2"], bcols),
                              padb(params["b3"], bcols),
                              padb(params["b4"], bcols)], axis=0),
    }
    return prepped, out_dim


@functools.partial(jax.jit,
                   static_argnames=("out_dim", "epilogue_bf16", "block_b_max"))
def ffnet_forward(x, prepped, *, out_dim, epilogue_bf16=False, block_b_max=512):
    """x: (B, input_size) f32.  prepped: output of prepare_params()."""
    B, in_dim = x.shape
    w1, w2, w3, w4, bias = (prepped["w1"], prepped["w2"], prepped["w3"],
                            prepped["w4"], prepped["b"])
    hid_p = w1.shape[1]
    out_p = w4.shape[1]
    bcols = bias.shape[1]

    # Adaptive batch tile: minimize padding waste, round to the bf16 sublane
    # pack (16).  Grid length >= ceil(B / block_b_max), so large B keeps both
    # v7x TensorCores busy via the "parallel" batch axis.
    n_steps = pl.cdiv(B, block_b_max)
    block_b = _round_up(-(-B // n_steps), 16)
    B_p = n_steps * block_b

    xp = x if B_p == B else jnp.pad(x, ((0, B_p - B), (0, 0)))

    ed = jnp.bfloat16 if epilogue_bf16 else jnp.float32
    kernel = functools.partial(ffnet_kernel, epilogue_dtype=ed)

    w_itemsize = jnp.dtype(w1.dtype).itemsize
    w_elems = in_dim * hid_p + 2 * hid_p * hid_p + hid_p * out_p
    flops = 2 * B_p * w_elems
    bytes_accessed = (B_p * in_dim * 4            # x (f32)
                      + w_elems * w_itemsize      # weights (bf16)
                      + 4 * bcols * 4             # biases (f32)
                      + B_p * out_p * 4)          # output (f32)

    full = lambda shape: pl.BlockSpec(shape, lambda i: (0, 0))

    out = pl.pallas_call(
        kernel,
        out_shape=jax.ShapeDtypeStruct((B_p, out_p), jnp.float32),
        grid_spec=pltpu.PrefetchScalarGridSpec(
            num_scalar_prefetch=0,
            grid=(B_p // block_b,),
            in_specs=[
                pl.BlockSpec((block_b, in_dim), lambda i: (i, 0)),  # x tile
                full((in_dim, hid_p)),                              # w1
                full((hid_p, hid_p)),                               # w2
                full((hid_p, hid_p)),                               # w3
                full((hid_p, out_p)),                               # w4
                full((4, bcols)),                                   # stacked biases
            ],
            out_specs=pl.BlockSpec((block_b, out_p), lambda i: (i, 0)),
        ),
        compiler_params=pltpu.CompilerParams(
            dimension_semantics=("parallel",)),
        cost_estimate=pl.CostEstimate(
            flops=flops, transcendentals=0, bytes_accessed=bytes_accessed),
    )(xp, w1, w2, w3, w4, bias)

    # Slice away feature/batch padding.  (If the consumer can take the padded
    # slab, returning `out` directly saves one XLA copy pass at large B.)
    return out[:B, :out_dim]


def init_params(key, input_size, hidden_size, output_size):
    """nn.Linear-style U(-1/sqrt(fan_in), 1/sqrt(fan_in)) init.

    Weights stored transposed as (in_features, out_features); biases (1, out).
    """
    def linear(k, fan_in, fan_out):
        kw, kb = jax.random.split(k)
        bound = 1.0 / jnp.sqrt(fan_in)
        w = jax.random.uniform(kw, (fan_in, fan_out), jnp.float32, -bound, bound)
        b = jax.random.uniform(kb, (1, fan_out), jnp.float32, -bound, bound)
        return w, b

    k1, k2, k3, k4 = jax.random.split(key, 4)
    w1, b1 = linear(k1, input_size, hidden_size)
    w2, b2 = linear(k2, hidden_size, hidden_size)
    w3, b3 = linear(k3, hidden_size, hidden_size)
    w4, b4 = linear(k4, hidden_size, output_size)
    return dict(w1=w1, b1=b1, w2=w2, b2=b2, w3=w3, b3=b3, w4=w4, b4=b4)


def ffnet_reference(x, p):
    relu = lambda v: jnp.maximum(v, 0.0)
    h = relu(x @ p["w1"] + p["b1"])
    h = relu(h @ p["w2"] + p["b2"])
    h = relu(h @ p["w3"] + p["b3"])
    return h @ p["w4"] + p["b4"]


if __name__ == "__main__":
    # Small shapes consistent with the module: FFNet(input_size, 350, 27).
    batch = 16
    input_size = 64
    hidden_size = 350
    output_size = 27

    key = jax.random.PRNGKey(0)
    k_x, k_p = jax.random.split(key)
    x = jax.random.normal(k_x, (batch, input_size), jnp.float32)
    params = init_params(k_p, input_size, hidden_size, output_size)

    # One-time weight prep (pad + cast to bf16) — off the per-call hot path.
    prepped, out_dim = prepare_params(params)

    # bf16 epilogue on chips with a bf16-capable VPU (v6e/v7x); f32 elsewhere.
    kind = jax.devices()[0].device_kind.lower()
    epilogue_bf16 = ("v6" in kind) or ("v7" in kind)

    out = ffnet_forward(x, prepped, out_dim=out_dim, epilogue_bf16=epilogue_bf16)
    out = jax.block_until_ready(out)

    ref = ffnet_reference(x, params)
    assert out.shape == (batch, output_size)
    # bf16 MXU operands (and bf16 epilogue on v6e/v7x) with f32 accumulation
    # -> looser tolerance vs the f32 reference.
    assert jnp.allclose(out, ref, atol=1e-1, rtol=1e-1), "mismatch vs reference"

    print("KERNEL_OK")
</pallas_src>

<mosaic_0001>
module attributes {stable_mosaic.version = 11 : i64} {
  func.func @ffnet_kernel(%arg0: i32, %arg1: memref<16x64xf32, #tpu.memory_space<vmem>>, %arg2: memref<64x384xbf16, #tpu.memory_space<vmem>>, %arg3: memref<384x384xbf16, #tpu.memory_space<vmem>>, %arg4: memref<384x384xbf16, #tpu.memory_space<vmem>>, %arg5: memref<384x128xbf16, #tpu.memory_space<vmem>>, %arg6: memref<4x384xf32, #tpu.memory_space<vmem>>, %arg7: memref<16x128xf32, #tpu.memory_space<vmem>>) attributes {dimension_semantics = [#tpu.dimension_semantics<parallel>], iteration_bounds = array<i64: 1>, scalar_prefetch = 0 : i64, scratch_operands = 0 : i64, tpu.core_type = #tpu.core_type<tc>, window_params = [{transform_indices = @transform_0, window_bounds = array<i64: 16, 64>}, {pipeline_mode = #tpu.pipeline_mode<synchronous>, transform_indices = @transform_1, window_bounds = array<i64: 64, 384>}, {pipeline_mode = #tpu.pipeline_mode<synchronous>, transform_indices = @transform_2, window_bounds = array<i64: 384, 384>}, {pipeline_mode = #tpu.pipeline_mode<synchronous>, transform_indices = @transform_3, window_bounds = array<i64: 384, 384>}, {pipeline_mode = #tpu.pipeline_mode<synchronous>, transform_indices = @transform_4, window_bounds = array<i64: 384, 128>}, {pipeline_mode = #tpu.pipeline_mode<synchronous>, transform_indices = @transform_5, window_bounds = array<i64: 4, 384>}, {transform_indices = @transform_6, window_bounds = array<i64: 16, 128>}]} {
    %c0 = arith.constant 0 : index
    %c0_0 = arith.constant 0 : index
    %0 = vector.load %arg6[%c0, %c0_0] : memref<4x384xf32, #tpu.memory_space<vmem>>, vector<4x384xf32>
    %1 = vector.extract_strided_slice %0 {offsets = [0, 0], sizes = [1, 384], strides = [1, 1]} : vector<4x384xf32> to vector<1x384xf32>
    %2 = vector.extract_strided_slice %0 {offsets = [1, 0], sizes = [1, 384], strides = [1, 1]} : vector<4x384xf32> to vector<1x384xf32>
    %3 = vector.extract_strided_slice %0 {offsets = [2, 0], sizes = [1, 384], strides = [1, 1]} : vector<4x384xf32> to vector<1x384xf32>
    %4 = vector.extract_strided_slice %0 {offsets = [3, 0], sizes = [1, 128], strides = [1, 1]} : vector<4x384xf32> to vector<1x128xf32>
    %c0_1 = arith.constant 0 : index
    %c0_2 = arith.constant 0 : index
    %5 = vector.load %arg1[%c0_1, %c0_2] : memref<16x64xf32, #tpu.memory_space<vmem>>, vector<16x64xf32>
    %6 = arith.truncf %5 : vector<16x64xf32> to vector<16x64xbf16>
    %c0_3 = arith.constant 0 : index
    %c0_4 = arith.constant 0 : index
    %7 = vector.load %arg2[%c0_3, %c0_4] : memref<64x384xbf16, #tpu.memory_space<vmem>>, vector<64x384xbf16>
    %cst = arith.constant dense<0.000000e+00> : vector<16x384xf32>
    %8 = tpu.matmul %6, %7, %cst {dimension_numbers = #tpu.dot_dimension_numbers<[1], [0], [0], [1], [0, 0, 1, 1], [], []>} : vector<16x64xbf16>, vector<64x384xbf16>, vector<16x384xf32> -> vector<16x384xf32>
    %9 = vector.broadcast %1 : vector<1x384xf32> to vector<16x384xf32>
    %10 = arith.addf %8, %9 : vector<16x384xf32>
    %cst_5 = arith.constant 0.000000e+00 : f32
    %11 = vector.broadcast %cst_5 : f32 to vector<16x384xf32>
    %12 = arith.maximumf %10, %11 : vector<16x384xf32>
    %13 = arith.truncf %12 : vector<16x384xf32> to vector<16x384xbf16>
    %c0_6 = arith.constant 0 : index
    %c0_7 = arith.constant 0 : index
    %14 = vector.load %arg3[%c0_6, %c0_7] : memref<384x384xbf16, #tpu.memory_space<vmem>>, vector<384x384xbf16>
    %cst_8 = arith.constant dense<0.000000e+00> : vector<16x384xf32>
    %15 = tpu.matmul %13, %14, %cst_8 {dimension_numbers = #tpu.dot_dimension_numbers<[1], [0], [0], [1], [0, 0, 1, 1], [], []>} : vector<16x384xbf16>, vector<384x384xbf16>, vector<16x384xf32> -> vector<16x384xf32>
    %16 = vector.broadcast %2 : vector<1x384xf32> to vector<16x384xf32>
    %17 = arith.addf %15, %16 : vector<16x384xf32>
    %cst_9 = arith.constant 0.000000e+00 : f32
    %18 = vector.broadcast %cst_9 : f32 to vector<16x384xf32>
    %19 = arith.maximumf %17, %18 : vector<16x384xf32>
    %20 = arith.truncf %19 : vector<16x384xf32> to vector<16x384xbf16>
    %c0_10 = arith.constant 0 : index
    %c0_11 = arith.constant 0 : index
    %21 = vector.load %arg4[%c0_10, %c0_11] : memref<384x384xbf16, #tpu.memory_space<vmem>>, vector<384x384xbf16>
    %cst_12 = arith.constant dense<0.000000e+00> : vector<16x384xf32>
    %22 = tpu.matmul %20, %21, %cst_12 {dimension_numbers = #tpu.dot_dimension_numbers<[1], [0], [0], [1], [0, 0, 1, 1], [], []>} : vector<16x384xbf16>, vector<384x384xbf16>, vector<16x384xf32> -> vector<16x384xf32>
    %23 = vector.broadcast %3 : vector<1x384xf32> to vector<16x384xf32>
    %24 = arith.addf %22, %23 : vector<16x384xf32>
    %cst_13 = arith.constant 0.000000e+00 : f32
    %25 = vector.broadcast %cst_13 : f32 to vector<16x384xf32>
    %26 = arith.maximumf %24, %25 : vector<16x384xf32>
    %27 = arith.truncf %26 : vector<16x384xf32> to vector<16x384xbf16>
    %c0_14 = arith.constant 0 : index
    %c0_15 = arith.constant 0 : index
    %28 = vector.load %arg5[%c0_14, %c0_15] : memref<384x128xbf16, #tpu.memory_space<vmem>>, vector<384x128xbf16>
    %cst_16 = arith.constant dense<0.000000e+00> : vector<16x128xf32>
    %29 = tpu.matmul %27, %28, %cst_16 {dimension_numbers = #tpu.dot_dimension_numbers<[1], [0], [0], [1], [0, 0, 1, 1], [], []>} : vector<16x384xbf16>, vector<384x128xbf16>, vector<16x128xf32> -> vector<16x128xf32>
    %30 = vector.broadcast %4 : vector<1x128xf32> to vector<16x128xf32>
    %31 = arith.addf %29, %30 : vector<16x128xf32>
    %c0_17 = arith.constant 0 : index
    %c0_18 = arith.constant 0 : index
    %32 = vector.load %arg7[%c0_17, %c0_18] : memref<16x128xf32, #tpu.memory_space<vmem>>, vector<16x128xf32>
    tpu.vector_store %arg7[%c0_17, %c0_18], %31 {strides = array<i32>} : memref<16x128xf32, #tpu.memory_space<vmem>>, vector<16x128xf32>,
    return
  }
  func.func @transform_0(%arg0: i32) -> (i32, i32) {
    %c0_i32 = arith.constant 0 : i32
    %c0_i32_0 = arith.constant 0 : i32
    return %arg0, %c0_i32 : i32, i32
  }
  func.func @transform_1(%arg0: i32) -> (i32, i32) {
    %c0_i32 = arith.constant 0 : i32
    %c0_i32_0 = arith.constant 0 : i32
    %c0_i32_1 = arith.constant 0 : i32
    return %c0_i32, %c0_i32_0 : i32, i32
  }
  func.func @transform_2(%arg0: i32) -> (i32, i32) {
    %c0_i32 = arith.constant 0 : i32
    %c0_i32_0 = arith.constant 0 : i32
    %c0_i32_1 = arith.constant 0 : i32
    return %c0_i32, %c0_i32_0 : i32, i32
  }
  func.func @transform_3(%arg0: i32) -> (i32, i32) {
    %c0_i32 = arith.constant 0 : i32
    %c0_i32_0 = arith.constant 0 : i32
    %c0_i32_1 = arith.constant 0 : i32
    return %c0_i32, %c0_i32_0 : i32, i32
  }
  func.func @transform_4(%arg0: i32) -> (i32, i32) {
    %c0_i32 = arith.constant 0 : i32
    %c0_i32_0 = arith.constant 0 : i32
    %c0_i32_1 = arith.constant 0 : i32
    return %c0_i32, %c0_i32_0 : i32, i32
  }
  func.func @transform_5(%arg0: i32) -> (i32, i32) {
    %c0_i32 = arith.constant 0 : i32
    %c0_i32_0 = arith.constant 0 : i32
    %c0_i32_1 = arith.constant 0 : i32
    return %c0_i32, %c0_i32_0 : i32, i32
  }
  func.func @transform_6(%arg0: i32) -> (i32, i32) {
    %c0_i32 = arith.constant 0 : i32
    %c0_i32_0 = arith.constant 0 : i32
    return %arg0, %c0_i32 : i32, i32
  }
}

</mosaic_0001>

<llo_original>
// kernel: ffnet_forward.1
$region0: #{ffnet_forward.1}
  #allocation0 [shape = 'u32[]', space=smem, size = 0x4, offset = 0x4, fixed_abs, tag = 'smem constant byte address 0x4 - core index']
  #allocation1 [shape = 'u32[144,128]{1,0:T(1,128)}', space=vmem, size = 0x12000, scoped, tag = 'internal scratch']
  %s0 = inlined_call_operand.hbm [shape: f32[16,64], index: 0, kind: input, shape index: {}]
  %s1 = inlined_call_operand.hbm [shape: bf16[64,384], index: 1, kind: input, shape index: {}]
  %s2 = inlined_call_operand.hbm [shape: bf16[384,384], index: 2, kind: input, shape index: {}]
  %s3 = inlined_call_operand.hbm [shape: bf16[384,384], index: 3, kind: input, shape index: {}]
  %s4 = inlined_call_operand.hbm [shape: bf16[384,128], index: 4, kind: input, shape index: {}]
  %s5 = inlined_call_operand.hbm [shape: f32[4,384], index: 5, kind: input, shape index: {}]
  %s6 = inlined_call_operand.hbm [shape: f32[16,128], index: 6, kind: output, shape index: {}]
  %s7 = sld [smem:[#allocation0]]
  $region58: #{ffnet_forward.1} parent=0
    _
  %s9 = ssub.s32 1, %s7
  %s10 = scalar_select 0, %s9, %s7
  $region1: #{ffnet_forward.1} parent=0
    #allocation2 [shape = 'u8[8192]{0}', space=vmem, size = 0x2000, scoped, tag = 'input window, operand 0, single buffered']
    #allocation3 [shape = 's32[1]{0}', space=sflag, size = 0x4, scoped, tag = 'scoped memory for ffnet_forward.1']
    #allocation4 [shape = 's32[1]{0}', space=sflag, size = 0x4, scoped, tag = 'scoped memory for ffnet_forward.1']
    #allocation5 [shape = 'u8[49152]{0}', space=vmem, size = 0xc000, scoped, tag = 'input window, operand 1, single buffered']
    #allocation6 [shape = 's32[1]{0}', space=sflag, size = 0x4, scoped, tag = 'scoped memory for ffnet_forward.1']
    #allocation7 [shape = 'u8[294912]{0}', space=vmem, size = 0x48000, scoped, tag = 'input window, operand 2, single buffered']
    #allocation8 [shape = 'u8[294912]{0}', space=vmem, size = 0x48000, scoped, tag = 'input window, operand 3, single buffered']
    #allocation9 [shape = 's32[1]{0}', space=sflag, size = 0x4, scoped, tag = 'scoped memory for ffnet_forward.1']
    #allocation10 [shape = 'u8[98304]{0}', space=vmem, size = 0x18000, scoped, tag = 'input window, operand 4, single buffered']
    #allocation11 [shape = 'u8[6144]{0}', space=vmem, size = 0x1800, scoped, tag = 'input window, operand 5, single buffered']
    #allocation12 [shape = 's32[1]{0}', space=sflag, size = 0x4, scoped, tag = 'scoped memory for ffnet_forward.1']
    #allocation13 [shape = 'u8[8192]{0}', space=vmem, size = 0x2000, scoped, tag = 'output window, operand 0, single buffered']
    %11 = vsyncpa [#allocation3], 0
    %12 = vsyncpa [#allocation6], 0
    %13 = vsyncpa [#allocation9], 0
    %14 = vsyncpa [#allocation12], 0
    %15 = vsyncpa [#allocation4], 0
    // Predicated region
    $region2: #{ffnet_forward.1} parent=1 // pred_check
      _
    $region3: #{ffnet_forward.1} parent=1 // pred_check_branch
      %17 = sbr.rel (0) target = $region5
    $region4: #{ffnet_forward.1} parent=1 // pred_region
      %s19 = ssub.s32 256, 256
      %20 = vsyncadd [#allocation3], %s19
      %s21 = sshll.u32 [#allocation2], 4
      %s22 = int_to_ptr.vmem [resolvable:$true] %s21
      %27 = dma.hbm_to_vmem [thread:$0]  %s0, 256, %s22, [#allocation3], 128, 128, 8
    $region5: #{ffnet_forward.1} parent=1 // pred_fallthru
      _
    // Predicated region
    $region6: #{ffnet_forward.1} parent=1 // pred_check
      _
    $region7: #{ffnet_forward.1} parent=1 // pred_check_branch
      %29 = sbr.rel (0) target = $region9
    $region8: #{ffnet_forward.1} parent=1 // pred_region
      %s31 = ssub.s32 1536, 1536
      %32 = vsyncadd [#allocation6], %s31
      %s33 = sshll.u32 [#allocation5], 4
      %s34 = int_to_ptr.vmem [resolvable:$true] %s33
      %39 = dma.hbm_to_vmem [thread:$0]  %s1, 1536, %s34, [#allocation6], 192, 192, 12
    $region9: #{ffnet_forward.1} parent=1 // pred_fallthru
      _
    // Predicated region
    $region10: #{ffnet_forward.1} parent=1 // pred_check
      _
    $region11: #{ffnet_forward.1} parent=1 // pred_check_branch
      %41 = sbr.rel (0) target = $region13
    $region12: #{ffnet_forward.1} parent=1 // pred_region
      %s43 = ssub.s32 9216, 9216
      %44 = vsyncadd [#allocation6], %s43
      %s45 = sshll.u32 [#allocation7], 4
      %s46 = int_to_ptr.vmem [resolvable:$true] %s45
      %51 = dma.hbm_to_vmem [thread:$0]  %s2, 9216, %s46, [#allocation6], 192, 192, 12
    $region13: #{ffnet_forward.1} parent=1 // pred_fallthru
      _
    // Predicated region
    $region14: #{ffnet_forward.1} parent=1 // pred_check
      _
    $region15: #{ffnet_forward.1} parent=1 // pred_check_branch
      %53 = sbr.rel (0) target = $region17
    $region16: #{ffnet_forward.1} parent=1 // pred_region
      %s55 = ssub.s32 9216, 9216
      %56 = vsyncadd [#allocation9], %s55
      %s57 = sshll.u32 [#allocation8], 4
      %s58 = int_to_ptr.vmem [resolvable:$true] %s57
      %63 = dma.hbm_to_vmem [thread:$0]  %s3, 9216, %s58, [#allocation9], 192, 192, 12
    $region17: #{ffnet_forward.1} parent=1 // pred_fallthru
      _
    // Predicated region
    $region18: #{ffnet_forward.1} parent=1 // pred_check
      _
    $region19: #{ffnet_forward.1} parent=1 // pred_check_branch
      %65 = sbr.rel (0) target = $region21
    $region20: #{ffnet_forward.1} parent=1 // pred_region
      %s67 = ssub.s32 3072, 3072
      %68 = vsyncadd [#allocation9], %s67
      %s69 = sshll.u32 [#allocation10], 4
      %s70 = int_to_ptr.vmem [resolvable:$true] %s69
      %75 = dma.hbm_to_vmem [thread:$0]  %s4, 3072, %s70, [#allocation9], 64, 64, 4
    $region21: #{ffnet_forward.1} parent=1 // pred_fallthru
      _
    // Predicated region
    $region22: #{ffnet_forward.1} parent=1 // pred_check
      _
    $region23: #{ffnet_forward.1} parent=1 // pred_check_branch
      %77 = sbr.rel (0) target = $region25
    $region24: #{ffnet_forward.1} parent=1 // pred_region
      %s79 = ssub.s32 192, 192
      %80 = vsyncadd [#allocation12], %s79
      %s82 = sshll.u32 [#allocation11], 4
      %s83 = int_to_ptr.vmem [resolvable:$true] %s82
      %85 = dma.hbm_to_vmem [thread:$0]  %s5, 192, %s83, [#allocation12]
    $region25: #{ffnet_forward.1} parent=1 // pred_fallthru
      _
    // Predicated region
    $region26: #{ffnet_forward.1} parent=1 // pred_check
      _
    $region27: #{ffnet_forward.1} parent=1 // pred_check_branch
      %87 = sbr.rel (0) target = $region29
    $region28: #{ffnet_forward.1} parent=1 // pred_region
      %88 = dma.done [#allocation3], 256
    $region29: #{ffnet_forward.1} parent=1 // pred_fallthru
      _
    // Predicated region
    $region30: #{ffnet_forward.1} parent=1 // pred_check
      _
    $region31: #{ffnet_forward.1} parent=1 // pred_check_branch
      %90 = sbr.rel (0) target = $region33
    $region32: #{ffnet_forward.1} parent=1 // pred_region
      %91 = dma.done [#allocation6], 1536
    $region33: #{ffnet_forward.1} parent=1 // pred_fallthru
      _
    // Predicated region
    $region34: #{ffnet_forward.1} parent=1 // pred_check
      _
    $region35: #{ffnet_forward.1} parent=1 // pred_check_branch
      %93 = sbr.rel (0) target = $region37
    $region36: #{ffnet_forward.1} parent=1 // pred_region
      %94 = dma.done [#allocation6], 9216
    $region37: #{ffnet_forward.1} parent=1 // pred_fallthru
      _
    // Predicated region
    $region38: #{ffnet_forward.1} parent=1 // pred_check
      _
    $region39: #{ffnet_forward.1} parent=1 // pred_check_branch
      %96 = sbr.rel (0) target = $region41
    $region40: #{ffnet_forward.1} parent=1 // pred_region
      %97 = dma.done [#allocation9], 9216
    $region41: #{ffnet_forward.1} parent=1 // pred_fallthru
      _
    // Predicated region
    $region42: #{ffnet_forward.1} parent=1 // pred_check
      _
    $region43: #{ffnet_forward.1} parent=1 // pred_check_branch
      %99 = sbr.rel (0) target = $region45
    $region44: #{ffnet_forward.1} parent=1 // pred_region
      %100 = dma.done [#allocation9], 3072
    $region45: #{ffnet_forward.1} parent=1 // pred_fallthru
      _
    // Predicated region
    $region46: #{ffnet_forward.1} parent=1 // pred_check
      _
    $region47: #{ffnet_forward.1} parent=1 // pred_check_branch
      %102 = sbr.rel (0) target = $region49
    $region48: #{ffnet_forward.1} parent=1 // pred_region
      %103 = dma.done [#allocation12], 192
    $region49: #{ffnet_forward.1} parent=1 // pred_fallthru
      _
    %v105 = vld [vmem:[#allocation11] sm:$0xff]
    %v106 = vld [vmem:[#allocation11 + $0x8] sm:$0xf]
    %v107 = vld [vmem:[#allocation2] sm:$0xff]
    %v108 = vld [vmem:[#allocation2 + $0x8] sm:$0xff]
    %v109 = vpack.c.bf16 %v108, %v107
    %v110 = vld [vmem:[#allocation5] sm:$0xff]
    %v111 = vld [vmem:[#allocation5 + $0x8] sm:$0xf]
    %v112 = vld [vmem:[#allocation5 + $0xc] sm:$0xff]
    %v113 = vld [vmem:[#allocation5 + $0x14] sm:$0xf]
    %v114 = vld [vmem:[#allocation5 + $0x18] sm:$0xff]
    %v115 = vld [vmem:[#allocation5 + $0x20] sm:$0xf]
    %v116 = vld [vmem:[#allocation5 + $0x24] sm:$0xff]
    %v117 = vld [vmem:[#allocation5 + $0x2c] sm:$0xf]
    %v118 = vld [vmem:[#allocation5 + $0x30] sm:$0xff]
    %v119 = vld [vmem:[#allocation5 + $0x38] sm:$0xf]
    %v120 = vld [vmem:[#allocation5 + $0x3c] sm:$0xff]
    %v121 = vld [vmem:[#allocation5 + $0x44] sm:$0xf]
    %v122 = vld [vmem:[#allocation5 + $0x48] sm:$0xff]
    %v123 = vld [vmem:[#allocation5 + $0x50] sm:$0xf]
    %v124 = vld [vmem:[#allocation5 + $0x54] sm:$0xff]
    %v125 = vld [vmem:[#allocation5 + $0x5c] sm:$0xf]
    %v128 = vlaneseq
    %v129 = vshrl.u32 %v128, 7
    %v130 = vsub.s32 0, %v129
    %v131 = vrot.slane %v105, %v130
    %v132 = vlaneseq
    %v133 = vshrl.u32 %v132, 7
    %v134 = vsub.s32 4, %v133
    %v135 = vrot.slane %v105, %v134
    %v136 = vlaneseq
    %v137 = vshrl.u32 %v136, 7
    %v138 = vsub.s32 0, %v137
    %v139 = vrot.slane %v106, %v138
    %v143 = vlaneseq
    %v144 = vshrl.u32 %v143, 7
    %v145 = vsub.s32 0, %v144
    %v146 = vrot.slane %v131, %v145
    %v147 = vlaneseq
    %v148 = vshrl.u32 %v147, 7
    %v149 = vsub.s32 0, %v148
    %v150 = vrot.slane %v135, %v149
    %v151 = vlaneseq
    %v152 = vshrl.u32 %v151, 7
    %v153 = vsub.s32 0, %v152
    %v154 = vrot.slane %v139, %v153
    %v171 = vunpack.c.l.b16 %v110
    %v172 = vunpack.c.h.b16 %v110
    %v173 = vunpack.c.l.b16 %v111
    %v174 = vunpack.c.l.b16 %v112
    %v175 = vunpack.c.h.b16 %v112
    %v176 = vunpack.c.l.b16 %v113
    %v177 = vunpack.c.l.b16 %v114
    %v178 = vunpack.c.h.b16 %v114
    %v179 = vunpack.c.l.b16 %v115
    %v180 = vunpack.c.l.b16 %v116
    %v181 = vunpack.c.h.b16 %v116
    %v182 = vunpack.c.l.b16 %v117
    %v183 = vunpack.c.l.b16 %v118
    %v184 = vunpack.c.h.b16 %v118
    %v185 = vunpack.c.l.b16 %v119
    %v186 = vunpack.c.l.b16 %v120
    %v187 = vunpack.c.h.b16 %v120
    %v188 = vunpack.c.l.b16 %v121
    %v189 = vunpack.c.l.b16 %v122
    %v190 = vunpack.c.h.b16 %v122
    %v191 = vunpack.c.l.b16 %v123
    %v192 = vunpack.c.l.b16 %v124
    %v193 = vunpack.c.h.b16 %v124
    %v194 = vunpack.c.l.b16 %v125
    %v195 = vpack.c.b16 %v174, %v171
    %v196 = vpack.c.b16 %v175, %v172
    %v197 = vpack.c.b16 %v176, %v173
    %v198 = vpack.c.b16 %v180, %v177
    %v199 = vpack.c.b16 %v181, %v178
    %v200 = vpack.c.b16 %v182, %v179
    %v201 = vpack.c.b16 %v186, %v183
    %v202 = vpack.c.b16 %v187, %v184
    %v203 = vpack.c.b16 %v188, %v185
    %v204 = vpack.c.b16 %v192, %v189
    %v205 = vpack.c.b16 %v193, %v190
    %v206 = vpack.c.b16 %v194, %v191
    %vm219 = vcmask 523264
    %v221 = vsel %vm219, %v109, 0
    %223 = vmatprep.subr.bf16.mxu0 %v196
    %224 = vmatpush1.bf16.msra.mxu0 %v195
    %225 = vmatprep.subr.bf16.mxu0 %v199
    %226 = vmatpush1.bf16.msra.mxu0 %v198
    %227 = vmatprep.subr.bf16.mxu0 %v202
    %228 = vmatpush1.bf16.msra.mxu0 %v201
    %229 = vmatprep.subr.bf16.mxu0 %v205
    %230 = vmatpush1.bf16.msra.mxu0 %v204
    %231 = vmatprep.subr.bf16.mxu0 0
    %232 = vmatpush1.bf16.msra.mxu0 0
    %233 = vmatprep.subr.bf16.mxu0 0
    %234 = vmatpush1.bf16.msra.mxu0 0
    %235 = vmatprep.subr.bf16.mxu0 0
    %236 = vmatpush1.bf16.msra.mxu0 0
    %237 = vmatprep.subr.bf16.mxu0 0
    %238 = vmatpush1.bf16.msra.mxu0 0
    %239 = vmatprep.subr.bf16.mxu0 0
    %240 = vmatpush1.bf16.msra.mxu0 0
    %241 = vmatprep.subr.bf16.mxu0 0
    %242 = vmatpush1.bf16.msra.mxu0 0
    %243 = vmatprep.subr.bf16.mxu0 0
    %244 = vmatpush1.bf16.msra.mxu0 0
    %245 = vmatprep.subr.bf16.mxu0 0
    %246 = vmatpush1.bf16.msra.mxu0 0
    %247 = vmatprep.subr.bf16.mxu0 0
    %248 = vmatpush1.bf16.msra.mxu0 0
    %249 = vmatprep.subr.bf16.mxu0 0
    %250 = vmatpush1.bf16.msra.mxu0 0
    %251 = vmatprep.subr.bf16.mxu0 0
    %252 = vmatpush1.bf16.msra.mxu0 0
    %253 = vmatprep.subr.bf16.mxu0 0
    %254 = vmatpush1.bf16.msra.mxu0 0
    %255 = vmatprep.mubr.bf16.mxu0 0
    %256 = vmatmul.mubr.bf16.gmra.mrb[0].mxu0 %v221
    %v257 = vpop.f32.mrb[0].mxu0
    %v258 = vadd.f32 %v146, %v257
    %v259 = vpop.f32.mrb[0].mxu0
    %v260 = vadd.f32 %v150, %v259
    %v261 = vpop.f32.mrb[0].mxu0
    %v262 = vadd.f32 %v146, %v261
    %v263 = vpop.f32.mrb[0].mxu0
    %v264 = vadd.f32 %v150, %v263
    %265 = vdwg.mxu0
    %266 = vmatprep.subr.bf16.mxu0 0
    %267 = vmatpush1.bf16.msra.mxu0 %v197
    %268 = vmatprep.subr.bf16.mxu0 0
    %269 = vmatpush1.bf16.msra.mxu0 %v200
    %270 = vmatprep.subr.bf16.mxu0 0
    %271 = vmatpush1.bf16.msra.mxu0 %v203
    %272 = vmatprep.subr.bf16.mxu0 0
    %273 = vmatpush1.bf16.msra.mxu0 %v206
    %274 = vmatprep.subr.bf16.mxu0 0
    %275 = vmatpush1.bf16.msra.mxu0 0
    %276 = vmatprep.subr.bf16.mxu0 0
    %277 = vmatpush1.bf16.msra.mxu0 0
    %278 = vmatprep.subr.bf16.mxu0 0
    %279 = vmatpush1.bf16.msra.mxu0 0
    %280 = vmatprep.subr.bf16.mxu0 0
    %281 = vmatpush1.bf16.msra.mxu0 0
    %282 = vmatprep.subr.bf16.mxu0 0
    %283 = vmatpush1.bf16.msra.mxu0 0
    %284 = vmatprep.subr.bf16.mxu0 0
    %285 = vmatpush1.bf16.msra.mxu0 0
    %286 = vmatprep.subr.bf16.mxu0 0
    %287 = vmatpush1.bf16.msra.mxu0 0
    %288 = vmatprep.subr.bf16.mxu0 0
    %289 = vmatpush1.bf16.msra.mxu0 0
    %290 = vmatprep.subr.bf16.mxu0 0
    %291 = vmatpush1.bf16.msra.mxu0 0
    %292 = vmatprep.subr.bf16.mxu0 0
    %293 = vmatpush1.bf16.msra.mxu0 0
    %294 = vmatprep.subr.bf16.mxu0 0
    %295 = vmatpush1.bf16.msra.mxu0 0
    %296 = vmatprep.subr.bf16.mxu0 0
    %297 = vmatpush1.bf16.msra.mxu0 0
    %298 = vmatprep.mubr.bf16.mxu0 0
    %299 = vmatmul.mubr.bf16.gmra.mrb[0].mxu0 %v221
    %v300 = vpop.f32.mrb[0].mxu0
    %v301 = vadd.f32 %v154, %v300
    %v302 = vpop.f32.mrb[0].mxu0
    %v303 = vpop.f32.mrb[0].mxu0
    %v304 = vadd.f32 %v154, %v303
    %v305 = vpop.f32.mrb[0].mxu0
    %306 = vdwg.mxu0
    %v307 = vmax.f32 %v258, 0.0
    %v308 = vmax.f32 %v260, 0.0
    %v309 = vmax.f32 %v301, 0.0
    %v310 = vmax.f32 %v262, 0.0
    %v311 = vmax.f32 %v264, 0.0
    %v312 = vmax.f32 %v304, 0.0
    %v313 = vpack.c.bf16 %v310, %v307
    %v314 = vpack.c.bf16 %v311, %v308
    %v315 = vpack.c.bf16 %v312, %v309
    %v316 = vld [vmem:[#allocation7] sm:$0xff]
    %v317 = vld [vmem:[#allocation7 + $0x8] sm:$0xf]
    %v318 = vld [vmem:[#allocation7 + $0xc] sm:$0xff]
    %v319 = vld [vmem:[#allocation7 + $0x14] sm:$0xf]
    %v320 = vld [vmem:[#allocation7 + $0x18] sm:$0xff]
    %v321 = vld [vmem:[#allocation7 + $0x20] sm:$0xf]
    %v322 = vld [vmem:[#allocation7 + $0x24] sm:$0xff]
    %v323 = vld [vmem:[#allocation7 + $0x2c] sm:$0xf]
    %v324 = vld [vmem:[#allocation7 + $0x30] sm:$0xff]
    %v325 = vld [vmem:[#allocation7 + $0x38] sm:$0xf]
    %v326 = vld [vmem:[#allocation7 + $0x3c] sm:$0xff]
    %v327 = vld [vmem:[#allocation7 + $0x44] sm:$0xf]
    %v328 = vld [vmem:[#allocation7 + $0x48] sm:$0xff]
    %v329 = vld [vmem:[#allocation7 + $0x50] sm:$0xf]
    %v330 = vld [vmem:[#allocation7 + $0x54] sm:$0xff]
    %v331 = vld [vmem:[#allocation7 + $0x5c] sm:$0xf]
    %v332 = vld [vmem:[#allocation7 + $0x60] sm:$0xff]
    %v333 = vld [vmem:[#allocation7 + $0x68] sm:$0xf]
    %v334 = vld [vmem:[#allocation7 + $0x6c] sm:$0xff]
    %v335 = vld [vmem:[#allocation7 + $0x74] sm:$0xf]
    %v336 = vld [vmem:[#allocation7 + $0x78] sm:$0xff]
    %v337 = vld [vmem:[#allocation7 + $0x80] sm:$0xf]
    %v338 = vld [vmem:[#allocation7 + $0x84] sm:$0xff]
    %v339 = vld [vmem:[#allocation7 + $0x8c] sm:$0xf]
    %v340 = vld [vmem:[#allocation7 + $0x90] sm:$0xff]
    %v341 = vld [vmem:[#allocation7 + $0x98] sm:$0xf]
    %v342 = vld [vmem:[#allocation7 + $0x9c] sm:$0xff]
    %v343 = vld [vmem:[#allocation7 + $0xa4] sm:$0xf]
    %v344 = vld [vmem:[#allocation7 + $0xa8] sm:$0xff]
    %v345 = vld [vmem:[#allocation7 + $0xb0] sm:$0xf]
    %v346 = vld [vmem:[#allocation7 + $0xb4] sm:$0xff]
    %v347 = vld [vmem:[#allocation7 + $0xbc] sm:$0xf]
    %v348 = vld [vmem:[#allocation7 + $0xc0] sm:$0xff]
    %v349 = vld [vmem:[#allocation7 + $0xc8] sm:$0xf]
    %v350 = vld [vmem:[#allocation7 + $0xcc] sm:$0xff]
    %v351 = vld [vmem:[#allocation7 + $0xd4] sm:$0xf]
    %v352 = vld [vmem:[#allocation7 + $0xd8] sm:$0xff]
    %v353 = vld [vmem:[#allocation7 + $0xe0] sm:$0xf]
    %v354 = vld [vmem:[#allocation7 + $0xe4] sm:$0xff]
    %v355 = vld [vmem:[#allocation7 + $0xec] sm:$0xf]
    %v356 = vld [vmem:[#allocation7 + $0xf0] sm:$0xff]
    %v357 = vld [vmem:[#allocation7 + $0xf8] sm:$0xf]
    %v358 = vld [vmem:[#allocation7 + $0xfc] sm:$0xff]
    %v359 = vld [vmem:[#allocation7 + $0x104] sm:$0xf]
    %v360 = vld [vmem:[#allocation7 + $0x108] sm:$0xff]
    %v361 = vld [vmem:[#allocation7 + $0x110] sm:$0xf]
    %v362 = vld [vmem:[#allocation7 + $0x114] sm:$0xff]
    %v363 = vld [vmem:[#allocation7 + $0x11c] sm:$0xf]
    %v364 = vld [vmem:[#allocation7 + $0x120] sm:$0xff]
    %v365 = vld [vmem:[#allocation7 + $0x128] sm:$0xf]
    %v366 = vld [vmem:[#allocation7 + $0x12c] sm:$0xff]
    %v367 = vld [vmem:[#allocation7 + $0x134] sm:$0xf]
    %v368 = vld [vmem:[#allocation7 + $0x138] sm:$0xff]
    %v369 = vld [vmem:[#allocation7 + $0x140] sm:$0xf]
    %v370 = vld [vmem:[#allocation7 + $0x144] sm:$0xff]
    %v371 = vld [vmem:[#allocation7 + $0x14c] sm:$0xf]
    %v372 = vld [vmem:[#allocation7 + $0x150] sm:$0xff]
    %v373 = vld [vmem:[#allocation7 + $0x158] sm:$0xf]
    %v374 = vld [vmem:[#allocation7 + $0x15c] sm:$0xff]
    %v375 = vld [vmem:[#allocation7 + $0x164] sm:$0xf]
    %v376 = vld [vmem:[#allocation7 + $0x168] sm:$0xff]
    %v377 = vld [vmem:[#allocation7 + $0x170] sm:$0xf]
    %v378 = vld [vmem:[#allocation7 + $0x174] sm:$0xff]
    %v379 = vld [vmem:[#allocation7 + $0x17c] sm:$0xf]
    %v380 = vld [vmem:[#allocation7 + $0x180] sm:$0xff]
    %v381 = vld [vmem:[#allocation7 + $0x188] sm:$0xf]
    %v382 = vld [vmem:[#allocation7 + $0x18c] sm:$0xff]
    %v383 = vld [vmem:[#allocation7 + $0x194] sm:$0xf]
    %v384 = vld [vmem:[#allocation7 + $0x198] sm:$0xff]
    %v385 = vld [vmem:[#allocation7 + $0x1a0] sm:$0xf]
    %v386 = vld [vmem:[#allocation7 + $0x1a4] sm:$0xff]
    %v387 = vld [vmem:[#allocation7 + $0x1ac] sm:$0xf]
    %v388 = vld [vmem:[#allocation7 + $0x1b0] sm:$0xff]
    %v389 = vld [vmem:[#allocation7 + $0x1b8] sm:$0xf]
    %v390 = vld [vmem:[#allocation7 + $0x1bc] sm:$0xff]
    %v391 = vld [vmem:[#allocation7 + $0x1c4] sm:$0xf]
    %v392 = vld [vmem:[#allocation7 + $0x1c8] sm:$0xff]
    %v393 = vld [vmem:[#allocation7 + $0x1d0] sm:$0xf]
    %v394 = vld [vmem:[#allocation7 + $0x1d4] sm:$0xff]
    %v395 = vld [vmem:[#allocation7 + $0x1dc] sm:$0xf]
    %v396 = vld [vmem:[#allocation7 + $0x1e0] sm:$0xff]
    %v397 = vld [vmem:[#allocation7 + $0x1e8] sm:$0xf]
    %v398 = vld [vmem:[#allocation7 + $0x1ec] sm:$0xff]
    %v399 = vld [vmem:[#allocation7 + $0x1f4] sm:$0xf]
    %v400 = vld [vmem:[#allocation7 + $0x1f8] sm:$0xff]
    %v401 = vld [vmem:[#allocation7 + $0x200] sm:$0xf]
    %v402 = vld [vmem:[#allocation7 + $0x204] sm:$0xff]
    %v403 = vld [vmem:[#allocation7 + $0x20c] sm:$0xf]
    %v404 = vld [vmem:[#allocation7 + $0x210] sm:$0xff]
    %v405 = vld [vmem:[#allocation7 + $0x218] sm:$0xf]
    %v406 = vld [vmem:[#allocation7 + $0x21c] sm:$0xff]
    %v407 = vld [vmem:[#allocation7 + $0x224] sm:$0xf]
    %v408 = vld [vmem:[#allocation7 + $0x228] sm:$0xff]
    %v409 = vld [vmem:[#allocation7 + $0x230] sm:$0xf]
    %v410 = vld [vmem:[#allocation7 + $0x234] sm:$0xff]
    %v411 = vld [vmem:[#allocation7 + $0x23c] sm:$0xf]
    %v412 = vlaneseq
    %v413 = vshrl.u32 %v412, 7
    %v414 = vsub.s32 1, %v413
    %v415 = vrot.slane %v105, %v414
    %v416 = vlaneseq
    %v417 = vshrl.u32 %v416, 7
    %v418 = vsub.s32 5, %v417
    %v419 = vrot.slane %v105, %v418
    %v420 = vlaneseq
    %v421 = vshrl.u32 %v420, 7
    %v422 = vsub.s32 1, %v421
    %v423 = vrot.slane %v106, %v422
    %v427 = vlaneseq
    %v428 = vshrl.u32 %v427, 7
    %v429 = vsub.s32 1, %v428
    %v430 = vrot.slane %v415, %v429
    %v431 = vlaneseq
    %v432 = vshrl.u32 %v431, 7
    %v433 = vsub.s32 1, %v432
    %v434 = vrot.slane %v419, %v433
    %v435 = vlaneseq
    %v436 = vshrl.u32 %v435, 7
    %v437 = vsub.s32 1, %v436
    %v438 = vrot.slane %v423, %v437
    %v535 = vunpack.c.l.b16 %v316
    %v536 = vunpack.c.h.b16 %v316
    %v537 = vunpack.c.l.b16 %v317
    %v538 = vunpack.c.l.b16 %v318
    %v539 = vunpack.c.h.b16 %v318
    %v540 = vunpack.c.l.b16 %v319
    %v541 = vunpack.c.l.b16 %v320
    %v542 = vunpack.c.h.b16 %v320
    %v543 = vunpack.c.l.b16 %v321
    %v544 = vunpack.c.l.b16 %v322
    %v545 = vunpack.c.h.b16 %v322
    %v546 = vunpack.c.l.b16 %v323
    %v547 = vunpack.c.l.b16 %v324
    %v548 = vunpack.c.h.b16 %v324
    %v549 = vunpack.c.l.b16 %v325
    %v550 = vunpack.c.l.b16 %v326
    %v551 = vunpack.c.h.b16 %v326
    %v552 = vunpack.c.l.b16 %v327
    %v553 = vunpack.c.l.b16 %v328
    %v554 = vunpack.c.h.b16 %v328
    %v555 = vunpack.c.l.b16 %v329
    %v556 = vunpack.c.l.b16 %v330
    %v557 = vunpack.c.h.b16 %v330
    %v558 = vunpack.c.l.b16 %v331
    %v559 = vunpack.c.l.b16 %v332
    %v560 = vunpack.c.h.b16 %v332
    %v561 = vunpack.c.l.b16 %v333
    %v562 = vunpack.c.l.b16 %v334
    %v563 = vunpack.c.h.b16 %v334
    %v564 = vunpack.c.l.b16 %v335
    %v565 = vunpack.c.l.b16 %v336
    %v566 = vunpack.c.h.b16 %v336
    %v567 = vunpack.c.l.b16 %v337
    %v568 = vunpack.c.l.b16 %v338
    %v569 = vunpack.c.h.b16 %v338
    %v570 = vunpack.c.l.b16 %v339
    %v571 = vunpack.c.l.b16 %v340
    %v572 = vunpack.c.h.b16 %v340
    %v573 = vunpack.c.l.b16 %v341
    %v574 = vunpack.c.l.b16 %v342
    %v575 = vunpack.c.h.b16 %v342
    %v576 = vunpack.c.l.b16 %v343
    %v577 = vunpack.c.l.b16 %v344
    %v578 = vunpack.c.h.b16 %v344
    %v579 = vunpack.c.l.b16 %v345
    %v580 = vunpack.c.l.b16 %v346
    %v581 = vunpack.c.h.b16 %v346
    %v582 = vunpack.c.l.b16 %v347
    %v583 = vunpack.c.l.b16 %v348
    %v584 = vunpack.c.h.b16 %v348
    %v585 = vunpack.c.l.b16 %v349
    %v586 = vunpack.c.l.b16 %v350
    %v587 = vunpack.c.h.b16 %v350
    %v588 = vunpack.c.l.b16 %v351
    %v589 = vunpack.c.l.b16 %v352
    %v590 = vunpack.c.h.b16 %v352
    %v591 = vunpack.c.l.b16 %v353
    %v592 = vunpack.c.l.b16 %v354
    %v593 = vunpack.c.h.b16 %v354
    %v594 = vunpack.c.l.b16 %v355
    %v595 = vunpack.c.l.b16 %v356
    %v596 = vunpack.c.h.b16 %v356
    %v597 = vunpack.c.l.b16 %v357
    %v598 = vunpack.c.l.b16 %v358
    %v599 = vunpack.c.h.b16 %v358
    %v600 = vunpack.c.l.b16 %v359
    %v601 = vunpack.c.l.b16 %v360
    %v602 = vunpack.c.h.b16 %v360
    %v603 = vunpack.c.l.b16 %v361
    %v604 = vunpack.c.l.b16 %v362
    %v605 = vunpack.c.h.b16 %v362
    %v606 = vunpack.c.l.b16 %v363
    %v607 = vunpack.c.l.b16 %v364
    %v608 = vunpack.c.h.b16 %v364
    %v609 = vunpack.c.l.b16 %v365
    %v610 = vunpack.c.l.b16 %v366
    %v611 = vunpack.c.h.b16 %v366
    %v612 = vunpack.c.l.b16 %v367
    %v613 = vunpack.c.l.b16 %v368
    %v614 = vunpack.c.h.b16 %v368
    %v615 = vunpack.c.l.b16 %v369
    %v616 = vunpack.c.l.b16 %v370
    %v617 = vunpack.c.h.b16 %v370
    %v618 = vunpack.c.l.b16 %v371
    %v619 = vunpack.c.l.b16 %v372
    %v620 = vunpack.c.h.b16 %v372
    %v621 = vunpack.c.l.b16 %v373
    %v622 = vunpack.c.l.b16 %v374
    %v623 = vunpack.c.h.b16 %v374
    %v624 = vunpack.c.l.b16 %v375
    %v625 = vunpack.c.l.b16 %v376
    %v626 = vunpack.c.h.b16 %v376
    %v627 = vunpack.c.l.b16 %v377
    %v628 = vunpack.c.l.b16 %v378
    %v629 = vunpack.c.h.b16 %v378
    %v630 = vunpack.c.l.b16 %v379
    %v631 = vunpack.c.l.b16 %v380
    %v632 = vunpack.c.h.b16 %v380
    %v633 = vunpack.c.l.b16 %v381
    %v634 = vunpack.c.l.b16 %v382
    %v635 = vunpack.c.h.b16 %v382
    %v636 = vunpack.c.l.b16 %v383
    %v637 = vunpack.c.l.b16 %v384
    %v638 = vunpack.c.h.b16 %v384
    %v639 = vunpack.c.l.b16 %v385
    %v640 = vunpack.c.l.b16 %v386
    %v641 = vunpack.c.h.b16 %v386
    %v642 = vunpack.c.l.b16 %v387
    %v643 = vunpack.c.l.b16 %v388
    %v644 = vunpack.c.h.b16 %v388
    %v645 = vunpack.c.l.b16 %v389
    %v646 = vunpack.c.l.b16 %v390
    %v647 = vunpack.c.h.b16 %v390
    %v648 = vunpack.c.l.b16 %v391
    %v649 = vunpack.c.l.b16 %v392
    %v650 = vunpack.c.h.b16 %v392
    %v651 = vunpack.c.l.b16 %v393
    %v652 = vunpack.c.l.b16 %v394
    %v653 = vunpack.c.h.b16 %v394
    %v654 = vunpack.c.l.b16 %v395
    %v655 = vunpack.c.l.b16 %v396
    %v656 = vunpack.c.h.b16 %v396
    %v657 = vunpack.c.l.b16 %v397
    %v658 = vunpack.c.l.b16 %v398
    %v659 = vunpack.c.h.b16 %v398
    %v660 = vunpack.c.l.b16 %v399
    %v661 = vunpack.c.l.b16 %v400
    %v662 = vunpack.c.h.b16 %v400
    %v663 = vunpack.c.l.b16 %v401
    %v664 = vunpack.c.l.b16 %v402
    %v665 = vunpack.c.h.b16 %v402
    %v666 = vunpack.c.l.b16 %v403
    %v667 = vunpack.c.l.b16 %v404
    %v668 = vunpack.c.h.b16 %v404
    %v669 = vunpack.c.l.b16 %v405
    %v670 = vunpack.c.l.b16 %v406
    %v671 = vunpack.c.h.b16 %v406
    %v672 = vunpack.c.l.b16 %v407
    %v673 = vunpack.c.l.b16 %v408
    %v674 = vunpack.c.h.b16 %v408
    %v675 = vunpack.c.l.b16 %v409
    %v676 = vunpack.c.l.b16 %v410
    %v677 = vunpack.c.h.b16 %v410
    %v678 = vunpack.c.l.b16 %v411
    %v679 = vpack.c.b16 %v538, %v535
    %v680 = vpack.c.b16 %v539, %v536
    %v681 = vpack.c.b16 %v540, %v537
    %v682 = vpack.c.b16 %v544, %v541
    %v683 = vpack.c.b16 %v545, %v542
    %v684 = vpack.c.b16 %v546, %v543
    %v685 = vpack.c.b16 %v550, %v547
    %v686 = vpack.c.b16 %v551, %v548
    %v687 = vpack.c.b16 %v552, %v549
    %v688 = vpack.c.b16 %v556, %v553
    %v689 = vpack.c.b16 %v557, %v554
    %v690 = vpack.c.b16 %v558, %v555
    %v691 = vpack.c.b16 %v562, %v559
    %v692 = vpack.c.b16 %v563, %v560
    %v693 = vpack.c.b16 %v564, %v561
    %v694 = vpack.c.b16 %v568, %v565
    %v695 = vpack.c.b16 %v569, %v566
    %v696 = vpack.c.b16 %v570, %v567
    %v697 = vpack.c.b16 %v574, %v571
    %v698 = vpack.c.b16 %v575, %v572
    %v699 = vpack.c.b16 %v576, %v573
    %v700 = vpack.c.b16 %v580, %v577
    %v701 = vpack.c.b16 %v581, %v578
    %v702 = vpack.c.b16 %v582, %v579
    %v703 = vpack.c.b16 %v586, %v583
    %v704 = vpack.c.b16 %v587, %v584
    %v705 = vpack.c.b16 %v588, %v585
    %v706 = vpack.c.b16 %v592, %v589
    %v707 = vpack.c.b16 %v593, %v590
    %v708 = vpack.c.b16 %v594, %v591
    %v709 = vpack.c.b16 %v598, %v595
    %v710 = vpack.c.b16 %v599, %v596
    %v711 = vpack.c.b16 %v600, %v597
    %v712 = vpack.c.b16 %v604, %v601
    %v713 = vpack.c.b16 %v605, %v602
    %v714 = vpack.c.b16 %v606, %v603
    %v715 = vpack.c.b16 %v610, %v607
    %v716 = vpack.c.b16 %v611, %v608
    %v717 = vpack.c.b16 %v612, %v609
    %v718 = vpack.c.b16 %v616, %v613
    %v719 = vpack.c.b16 %v617, %v614
    %v720 = vpack.c.b16 %v618, %v615
    %v721 = vpack.c.b16 %v622, %v619
    %v722 = vpack.c.b16 %v623, %v620
    %v723 = vpack.c.b16 %v624, %v621
    %v724 = vpack.c.b16 %v628, %v625
    %v725 = vpack.c.b16 %v629, %v626
    %v726 = vpack.c.b16 %v630, %v627
    %v727 = vpack.c.b16 %v634, %v631
    %v728 = vpack.c.b16 %v635, %v632
    %v729 = vpack.c.b16 %v636, %v633
    %v730 = vpack.c.b16 %v640, %v637
    %v731 = vpack.c.b16 %v641, %v638
    %v732 = vpack.c.b16 %v642, %v639
    %v733 = vpack.c.b16 %v646, %v643
    %v734 = vpack.c.b16 %v647, %v644
    %v735 = vpack.c.b16 %v648, %v645
    %v736 = vpack.c.b16 %v652, %v649
    %v737 = vpack.c.b16 %v653, %v650
    %v738 = vpack.c.b16 %v654, %v651
    %v739 = vpack.c.b16 %v658, %v655
    %v740 = vpack.c.b16 %v659, %v656
    %v741 = vpack.c.b16 %v660, %v657
    %v742 = vpack.c.b16 %v664, %v661
    %v743 = vpack.c.b16 %v665, %v662
    %v744 = vpack.c.b16 %v666, %v663
    %v745 = vpack.c.b16 %v670, %v667
    %v746 = vpack.c.b16 %v671, %v668
    %v747 = vpack.c.b16 %v672, %v669
    %v748 = vpack.c.b16 %v676, %v673
    %v749 = vpack.c.b16 %v677, %v674
    %v750 = vpack.c.b16 %v678, %v675
    %823 = vmatprep.subr.bf16.mxu0 %v680
    %824 = vmatpush1.bf16.msra.mxu0 %v679
    %825 = vmatprep.subr.bf16.mxu0 %v683
    %826 = vmatpush1.bf16.msra.mxu0 %v682
    %827 = vmatprep.subr.bf16.mxu0 %v686
    %828 = vmatpush1.bf16.msra.mxu0 %v685
    %829 = vmatprep.subr.bf16.mxu0 %v689
    %830 = vmatpush1.bf16.msra.mxu0 %v688
    %831 = vmatprep.subr.bf16.mxu0 %v692
    %832 = vmatpush1.bf16.msra.mxu0 %v691
    %833 = vmatprep.subr.bf16.mxu0 %v695
    %834 = vmatpush1.bf16.msra.mxu0 %v694
    %835 = vmatprep.subr.bf16.mxu0 %v698
    %836 = vmatpush1.bf16.msra.mxu0 %v697
    %837 = vmatprep.subr.bf16.mxu0 %v701
    %838 = vmatpush1.bf16.msra.mxu0 %v700
    %839 = vmatprep.subr.bf16.mxu0 %v704
    %840 = vmatpush1.bf16.msra.mxu0 %v703
    %841 = vmatprep.subr.bf16.mxu0 %v707
    %842 = vmatpush1.bf16.msra.mxu0 %v706
    %843 = vmatprep.subr.bf16.mxu0 %v710
    %844 = vmatpush1.bf16.msra.mxu0 %v709
    %845 = vmatprep.subr.bf16.mxu0 %v713
    %846 = vmatpush1.bf16.msra.mxu0 %v712
    %847 = vmatprep.subr.bf16.mxu0 %v716
    %848 = vmatpush1.bf16.msra.mxu0 %v715
    %849 = vmatprep.subr.bf16.mxu0 %v719
    %850 = vmatpush1.bf16.msra.mxu0 %v718
    %851 = vmatprep.subr.bf16.mxu0 %v722
    %852 = vmatpush1.bf16.msra.mxu0 %v721
    %853 = vmatprep.subr.bf16.mxu0 %v725
    %854 = vmatpush1.bf16.msra.mxu0 %v724
    %855 = vmatprep.mubr.bf16.mxu0 %v314
    %856 = vmatmul.mubr.bf16.gmra.mrb[0].mxu0 %v313
    %v857 = vpop.f32.mrb[0].mxu0
    %v858 = vadd.f32 %v430, %v857
    %v859 = vpop.f32.mrb[0].mxu0
    %v860 = vadd.f32 %v434, %v859
    %v861 = vpop.f32.mrb[0].mxu0
    %v862 = vadd.f32 %v430, %v861
    %v863 = vpop.f32.mrb[0].mxu0
    %v864 = vadd.f32 %v434, %v863
    %865 = vdwg.mxu0
    %866 = vmatprep.subr.bf16.mxu0 %v728
    %867 = vmatpush1.bf16.msra.mxu0 %v727
    %868 = vmatprep.subr.bf16.mxu0 %v731
    %869 = vmatpush1.bf16.msra.mxu0 %v730
    %870 = vmatprep.subr.bf16.mxu0 %v734
    %871 = vmatpush1.bf16.msra.mxu0 %v733
    %872 = vmatprep.subr.bf16.mxu0 %v737
    %873 = vmatpush1.bf16.msra.mxu0 %v736
    %874 = vmatprep.subr.bf16.mxu0 %v740
    %875 = vmatpush1.bf16.msra.mxu0 %v739
    %876 = vmatprep.subr.bf16.mxu0 %v743
    %877 = vmatpush1.bf16.msra.mxu0 %v742
    %878 = vmatprep.subr.bf16.mxu0 %v746
    %879 = vmatpush1.bf16.msra.mxu0 %v745
    %880 = vmatprep.subr.bf16.mxu0 %v749
    %881 = vmatpush1.bf16.msra.mxu0 %v748
    %882 = vmatprep.subr.bf16.mxu0 0
    %883 = vmatpush1.bf16.msra.mxu0 0
    %884 = vmatprep.subr.bf16.mxu0 0
    %885 = vmatpush1.bf16.msra.mxu0 0
    %886 = vmatprep.subr.bf16.mxu0 0
    %887 = vmatpush1.bf16.msra.mxu0 0
    %888 = vmatprep.subr.bf16.mxu0 0
    %889 = vmatpush1.bf16.msra.mxu0 0
    %890 = vmatprep.subr.bf16.mxu0 0
    %891 = vmatpush1.bf16.msra.mxu0 0
    %892 = vmatprep.subr.bf16.mxu0 0
    %893 = vmatpush1.bf16.msra.mxu0 0
    %894 = vmatprep.subr.bf16.mxu0 0
    %895 = vmatpush1.bf16.msra.mxu0 0
    %896 = vmatprep.subr.bf16.mxu0 0
    %897 = vmatpush1.bf16.msra.mxu0 0
    %898 = vmatprep.mubr.bf16.mxu0 0
    %899 = vmatmul.mubr.bf16.gmra.mrb[0].mxu0 %v315
    %v900 = vpop.f32.mrb[0].mxu0
    %v901 = vadd.f32 %v858, %v900
    %v902 = vpop.f32.mrb[0].mxu0
    %v903 = vadd.f32 %v860, %v902
    %v904 = vpop.f32.mrb[0].mxu0
    %v905 = vadd.f32 %v862, %v904
    %v906 = vpop.f32.mrb[0].mxu0
    %v907 = vadd.f32 %v864, %v906
    %908 = vdwg.mxu0
    %909 = vmatprep.subr.bf16.mxu0 0
    %910 = vmatpush1.bf16.msra.mxu0 %v681
    %911 = vmatprep.subr.bf16.mxu0 0
    %912 = vmatpush1.bf16.msra.mxu0 %v684
    %913 = vmatprep.subr.bf16.mxu0 0
    %914 = vmatpush1.bf16.msra.mxu0 %v687
    %915 = vmatprep.subr.bf16.mxu0 0
    %916 = vmatpush1.bf16.msra.mxu0 %v690
    %917 = vmatprep.subr.bf16.mxu0 0
    %918 = vmatpush1.bf16.msra.mxu0 %v693
    %919 = vmatprep.subr.bf16.mxu0 0
    %920 = vmatpush1.bf16.msra.mxu0 %v696
    %921 = vmatprep.subr.bf16.mxu0 0
    %922 = vmatpush1.bf16.msra.mxu0 %v699
    %923 = vmatprep.subr.bf16.mxu0 0
    %924 = vmatpush1.bf16.msra.mxu0 %v702
    %925 = vmatprep.subr.bf16.mxu0 0
    %926 = vmatpush1.bf16.msra.mxu0 %v705
    %927 = vmatprep.subr.bf16.mxu0 0
    %928 = vmatpush1.bf16.msra.mxu0 %v708
    %929 = vmatprep.subr.bf16.mxu0 0
    %930 = vmatpush1.bf16.msra.mxu0 %v711
    %931 = vmatprep.subr.bf16.mxu0 0
    %932 = vmatpush1.bf16.msra.mxu0 %v714
    %933 = vmatprep.subr.bf16.mxu0 0
    %934 = vmatpush1.bf16.msra.mxu0 %v717
    %935 = vmatprep.subr.bf16.mxu0 0
    %936 = vmatpush1.bf16.msra.mxu0 %v720
    %937 = vmatprep.subr.bf16.mxu0 0
    %938 = vmatpush1.bf16.msra.mxu0 %v723
    %939 = vmatprep.subr.bf16.mxu0 0
    %940 = vmatpush1.bf16.msra.mxu0 %v726
    %941 = vmatprep.mubr.bf16.mxu0 %v314
    %942 = vmatmul.mubr.bf16.gmra.mrb[0].mxu0 %v313
    %v943 = vpop.f32.mrb[0].mxu0
    %v944 = vadd.f32 %v438, %v943
    %v945 = vpop.f32.mrb[0].mxu0
    %v946 = vpop.f32.mrb[0].mxu0
    %v947 = vadd.f32 %v438, %v946
    %v948 = vpop.f32.mrb[0].mxu0
    %949 = vdwg.mxu0
    %950 = vmatprep.subr.bf16.mxu0 0
    %951 = vmatpush1.bf16.msra.mxu0 %v729
    %952 = vmatprep.subr.bf16.mxu0 0
    %953 = vmatpush1.bf16.msra.mxu0 %v732
    %954 = vmatprep.subr.bf16.mxu0 0
    %955 = vmatpush1.bf16.msra.mxu0 %v735
    %956 = vmatprep.subr.bf16.mxu0 0
    %957 = vmatpush1.bf16.msra.mxu0 %v738
    %958 = vmatprep.subr.bf16.mxu0 0
    %959 = vmatpush1.bf16.msra.mxu0 %v741
    %960 = vmatprep.subr.bf16.mxu0 0
    %961 = vmatpush1.bf16.msra.mxu0 %v744
    %962 = vmatprep.subr.bf16.mxu0 0
    %963 = vmatpush1.bf16.msra.mxu0 %v747
    %964 = vmatprep.subr.bf16.mxu0 0
    %965 = vmatpush1.bf16.msra.mxu0 %v750
    %966 = vmatprep.subr.bf16.mxu0 0
    %967 = vmatpush1.bf16.msra.mxu0 0
    %968 = vmatprep.subr.bf16.mxu0 0
    %969 = vmatpush1.bf16.msra.mxu0 0
    %970 = vmatprep.subr.bf16.mxu0 0
    %971 = vmatpush1.bf16.msra.mxu0 0
    %972 = vmatprep.subr.bf16.mxu0 0
    %973 = vmatpush1.bf16.msra.mxu0 0
    %974 = vmatprep.subr.bf16.mxu0 0
    %975 = vmatpush1.bf16.msra.mxu0 0
    %976 = vmatprep.subr.bf16.mxu0 0
    %977 = vmatpush1.bf16.msra.mxu0 0
    %978 = vmatprep.subr.bf16.mxu0 0
    %979 = vmatpush1.bf16.msra.mxu0 0
    %980 = vmatprep.subr.bf16.mxu0 0
    %981 = vmatpush1.bf16.msra.mxu0 0
    %982 = vmatprep.mubr.bf16.mxu0 0
    %983 = vmatmul.mubr.bf16.gmra.mrb[0].mxu0 %v315
    %v984 = vpop.f32.mrb[0].mxu0
    %v985 = vadd.f32 %v944, %v984
    %v986 = vpop.f32.mrb[0].mxu0
    %v987 = vpop.f32.mrb[0].mxu0
    %v988 = vadd.f32 %v947, %v987
    %v989 = vpop.f32.mrb[0].mxu0
    %990 = vdwg.mxu0
    %v991 = vmax.f32 %v901, 0.0
    %v992 = vmax.f32 %v903, 0.0
    %v993 = vmax.f32 %v985, 0.0
    %v994 = vmax.f32 %v905, 0.0
    %v995 = vmax.f32 %v907, 0.0
    %v996 = vmax.f32 %v988, 0.0
    %v997 = vpack.c.bf16 %v994, %v991
    %v998 = vpack.c.bf16 %v995, %v992
    %v999 = vpack.c.bf16 %v996, %v993
    %v1000 = vld [vmem:[#allocation8] sm:$0xff]
    %v1001 = vld [vmem:[#allocation8 + $0x8] sm:$0xf]
    %v1002 = vld [vmem:[#allocation8 + $0xc] sm:$0xff]
    %v1003 = vld [vmem:[#allocation8 + $0x14] sm:$0xf]
    %v1004 = vld [vmem:[#allocation8 + $0x18] sm:$0xff]
    %v1005 = vld [vmem:[#allocation8 + $0x20] sm:$0xf]
    %v1006 = vld [vmem:[#allocation8 + $0x24] sm:$0xff]
    %v1007 = vld [vmem:[#allocation8 + $0x2c] sm:$0xf]
    %v1008 = vld [vmem:[#allocation8 + $0x30] sm:$0xff]
    %v1009 = vld [vmem:[#allocation8 + $0x38] sm:$0xf]
    %v1010 = vld [vmem:[#allocation8 + $0x3c] sm:$0xff]
    %v1011 = vld [vmem:[#allocation8 + $0x44] sm:$0xf]
    %v1012 = vld [vmem:[#allocation8 + $0x48] sm:$0xff]
    %v1013 = vld [vmem:[#allocation8 + $0x50] sm:$0xf]
    %v1014 = vld [vmem:[#allocation8 + $0x54] sm:$0xff]
    %v1015 = vld [vmem:[#allocation8 + $0x5c] sm:$0xf]
    %v1016 = vld [vmem:[#allocation8 + $0x60] sm:$0xff]
    %v1017 = vld [vmem:[#allocation8 + $0x68] sm:$0xf]
    %v1018 = vld [vmem:[#allocation8 + $0x6c] sm:$0xff]
    %v1019 = vld [vmem:[#allocation8 + $0x74] sm:$0xf]
    %v1020 = vld [vmem:[#allocation8 + $0x78] sm:$0xff]
    %v1021 = vld [vmem:[#allocation8 + $0x80] sm:$0xf]
    %v1022 = vld [vmem:[#allocation8 + $0x84] sm:$0xff]
    %v1023 = vld [vmem:[#allocation8 + $0x8c] sm:$0xf]
    %v1024 = vld [vmem:[#allocation8 + $0x90] sm:$0xff]
    %v1025 = vld [vmem:[#allocation8 + $0x98] sm:$0xf]
    %v1026 = vld [vmem:[#allocation8 + $0x9c] sm:$0xff]
    %v1027 = vld [vmem:[#allocation8 + $0xa4] sm:$0xf]
    %v1028 = vld [vmem:[#allocation8 + $0xa8] sm:$0xff]
    %v1029 = vld [vmem:[#allocation8 + $0xb0] sm:$0xf]
    %v1030 = vld [vmem:[#allocation8 + $0xb4] sm:$0xff]
    %v1031 = vld [vmem:[#allocation8 + $0xbc] sm:$0xf]
    %v1032 = vld [vmem:[#allocation8 + $0xc0] sm:$0xff]
    %v1033 = vld [vmem:[#allocation8 + $0xc8] sm:$0xf]
    %v1034 = vld [vmem:[#allocation8 + $0xcc] sm:$0xff]
    %v1035 = vld [vmem:[#allocation8 + $0xd4] sm:$0xf]
    %v1036 = vld [vmem:[#allocation8 + $0xd8] sm:$0xff]
    %v1037 = vld [vmem:[#allocation8 + $0xe0] sm:$0xf]
    %v1038 = vld [vmem:[#allocation8 + $0xe4] sm:$0xff]
    %v1039 = vld [vmem:[#allocation8 + $0xec] sm:$0xf]
    %v1040 = vld [vmem:[#allocation8 + $0xf0] sm:$0xff]
    %v1041 = vld [vmem:[#allocation8 + $0xf8] sm:$0xf]
    %v1042 = vld [vmem:[#allocation8 + $0xfc] sm:$0xff]
    %v1043 = vld [vmem:[#allocation8 + $0x104] sm:$0xf]
    %v1044 = vld [vmem:[#allocation8 + $0x108] sm:$0xff]
    %v1045 = vld [vmem:[#allocation8 + $0x110] sm:$0xf]
    %v1046 = vld [vmem:[#allocation8 + $0x114] sm:$0xff]
    %v1047 = vld [vmem:[#allocation8 + $0x11c] sm:$0xf]
    %v1048 = vld [vmem:[#allocation8 + $0x120] sm:$0xff]
    %v1049 = vld [vmem:[#allocation8 + $0x128] sm:$0xf]
    %v1050 = vld [vmem:[#allocation8 + $0x12c] sm:$0xff]
    %v1051 = vld [vmem:[#allocation8 + $0x134] sm:$0xf]
    %v1052 = vld [vmem:[#allocation8 + $0x138] sm:$0xff]
    %v1053 = vld [vmem:[#allocation8 + $0x140] sm:$0xf]
    %v1054 = vld [vmem:[#allocation8 + $0x144] sm:$0xff]
    %v1055 = vld [vmem:[#allocation8 + $0x14c] sm:$0xf]
    %v1056 = vld [vmem:[#allocation8 + $0x150] sm:$0xff]
    %v1057 = vld [vmem:[#allocation8 + $0x158] sm:$0xf]
    %v1058 = vld [vmem:[#allocation8 + $0x15c] sm:$0xff]
    %v1059 = vld [vmem:[#allocation8 + $0x164] sm:$0xf]
    %v1060 = vld [vmem:[#allocation8 + $0x168] sm:$0xff]
    %v1061 = vld [vmem:[#allocation8 + $0x170] sm:$0xf]
    %v1062 = vld [vmem:[#allocation8 + $0x174] sm:$0xff]
    %v1063 = vld [vmem:[#allocation8 + $0x17c] sm:$0xf]
    %v1064 = vld [vmem:[#allocation8 + $0x180] sm:$0xff]
    %v1065 = vld [vmem:[#allocation8 + $0x188] sm:$0xf]
    %v1066 = vld [vmem:[#allocation8 + $0x18c] sm:$0xff]
    %v1067 = vld [vmem:[#allocation8 + $0x194] sm:$0xf]
    %v1068 = vld [vmem:[#allocation8 + $0x198] sm:$0xff]
    %v1069 = vld [vmem:[#allocation8 + $0x1a0] sm:$0xf]
    %v1070 = vld [vmem:[#allocation8 + $0x1a4] sm:$0xff]
    %v1071 = vld [vmem:[#allocation8 + $0x1ac] sm:$0xf]
    %v1072 = vld [vmem:[#allocation8 + $0x1b0] sm:$0xff]
    %v1073 = vld [vmem:[#allocation8 + $0x1b8] sm:$0xf]
    %v1074 = vld [vmem:[#allocation8 + $0x1bc] sm:$0xff]
    %v1075 = vld [vmem:[#allocation8 + $0x1c4] sm:$0xf]
    %v1076 = vld [vmem:[#allocation8 + $0x1c8] sm:$0xff]
    %v1077 = vld [vmem:[#allocation8 + $0x1d0] sm:$0xf]
    %v1078 = vld [vmem:[#allocation8 + $0x1d4] sm:$0xff]
    %v1079 = vld [vmem:[#allocation8 + $0x1dc] sm:$0xf]
    %v1080 = vld [vmem:[#allocation8 + $0x1e0] sm:$0xff]
    %v1081 = vld [vmem:[#allocation8 + $0x1e8] sm:$0xf]
    %v1082 = vld [vmem:[#allocation8 + $0x1ec] sm:$0xff]
    %v1083 = vld [vmem:[#allocation8 + $0x1f4] sm:$0xf]
    %v1084 = vld [vmem:[#allocation8 + $0x1f8] sm:$0xff]
    %v1085 = vld [vmem:[#allocation8 + $0x200] sm:$0xf]
    %v1086 = vld [vmem:[#allocation8 + $0x204] sm:$0xff]
    %v1087 = vld [vmem:[#allocation8 + $0x20c] sm:$0xf]
    %v1088 = vld [vmem:[#allocation8 + $0x210] sm:$0xff]
    %v1089 = vld [vmem:[#allocation8 + $0x218] sm:$0xf]
    %v1090 = vld [vmem:[#allocation8 + $0x21c] sm:$0xff]
    %v1091 = vld [vmem:[#allocation8 + $0x224] sm:$0xf]
    %v1092 = vld [vmem:[#allocation8 + $0x228] sm:$0xff]
    %v1093 = vld [vmem:[#allocation8 + $0x230] sm:$0xf]
    %v1094 = vld [vmem:[#allocation8 + $0x234] sm:$0xff]
    %v1095 = vld [vmem:[#allocation8 + $0x23c] sm:$0xf]
    %v1096 = vlaneseq
    %v1097 = vshrl.u32 %v1096, 7
    %v1098 = vsub.s32 2, %v1097
    %v1099 = vrot.slane %v105, %v1098
    %v1100 = vlaneseq
    %v1101 = vshrl.u32 %v1100, 7
    %v1102 = vsub.s32 6, %v1101
    %v1103 = vrot.slane %v105, %v1102
    %v1104 = vlaneseq
    %v1105 = vshrl.u32 %v1104, 7
    %v1106 = vsub.s32 2, %v1105
    %v1107 = vrot.slane %v106, %v1106
    %v1111 = vlaneseq
    %v1112 = vshrl.u32 %v1111, 7
    %v1113 = vsub.s32 2, %v1112
    %v1114 = vrot.slane %v1099, %v1113
    %v1115 = vlaneseq
    %v1116 = vshrl.u32 %v1115, 7
    %v1117 = vsub.s32 2, %v1116
    %v1118 = vrot.slane %v1103, %v1117
    %v1119 = vlaneseq
    %v1120 = vshrl.u32 %v1119, 7
    %v1121 = vsub.s32 2, %v1120
    %v1122 = vrot.slane %v1107, %v1121
    %v1219 = vunpack.c.l.b16 %v1000
    %v1220 = vunpack.c.h.b16 %v1000
    %v1221 = vunpack.c.l.b16 %v1001
    %v1222 = vunpack.c.l.b16 %v1002
    %v1223 = vunpack.c.h.b16 %v1002
    %v1224 = vunpack.c.l.b16 %v1003
    %v1225 = vunpack.c.l.b16 %v1004
    %v1226 = vunpack.c.h.b16 %v1004
    %v1227 = vunpack.c.l.b16 %v1005
    %v1228 = vunpack.c.l.b16 %v1006
    %v1229 = vunpack.c.h.b16 %v1006
    %v1230 = vunpack.c.l.b16 %v1007
    %v1231 = vunpack.c.l.b16 %v1008
    %v1232 = vunpack.c.h.b16 %v1008
    %v1233 = vunpack.c.l.b16 %v1009
    %v1234 = vunpack.c.l.b16 %v1010
    %v1235 = vunpack.c.h.b16 %v1010
    %v1236 = vunpack.c.l.b16 %v1011
    %v1237 = vunpack.c.l.b16 %v1012
    %v1238 = vunpack.c.h.b16 %v1012
    %v1239 = vunpack.c.l.b16 %v1013
    %v1240 = vunpack.c.l.b16 %v1014
    %v1241 = vunpack.c.h.b16 %v1014
    %v1242 = vunpack.c.l.b16 %v1015
    %v1243 = vunpack.c.l.b16 %v1016
    %v1244 = vunpack.c.h.b16 %v1016
    %v1245 = vunpack.c.l.b16 %v1017
    %v1246 = vunpack.c.l.b16 %v1018
    %v1247 = vunpack.c.h.b16 %v1018
    %v1248 = vunpack.c.l.b16 %v1019
    %v1249 = vunpack.c.l.b16 %v1020
    %v1250 = vunpack.c.h.b16 %v1020
    %v1251 = vunpack.c.l.b16 %v1021
    %v1252 = vunpack.c.l.b16 %v1022
    %v1253 = vunpack.c.h.b16 %v1022
    %v1254 = vunpack.c.l.b16 %v1023
    %v1255 = vunpack.c.l.b16 %v1024
    %v1256 = vunpack.c.h.b16 %v1024
    %v1257 = vunpack.c.l.b16 %v1025
    %v1258 = vunpack.c.l.b16 %v1026
    %v1259 = vunpack.c.h.b16 %v1026
    %v1260 = vunpack.c.l.b16 %v1027
    %v1261 = vunpack.c.l.b16 %v1028
    %v1262 = vunpack.c.h.b16 %v1028
    %v1263 = vunpack.c.l.b16 %v1029
    %v1264 = vunpack.c.l.b16 %v1030
    %v1265 = vunpack.c.h.b16 %v1030
    %v1266 = vunpack.c.l.b16 %v1031
    %v1267 = vunpack.c.l.b16 %v1032
    %v1268 = vunpack.c.h.b16 %v1032
    %v1269 = vunpack.c.l.b16 %v1033
    %v1270 = vunpack.c.l.b16 %v1034
    %v1271 = vunpack.c.h.b16 %v1034
    %v1272 = vunpack.c.l.b16 %v1035
    %v1273 = vunpack.c.l.b16 %v1036
    %v1274 = vunpack.c.h.b16 %v1036
    %v1275 = vunpack.c.l.b16 %v1037
    %v1276 = vunpack.c.l.b16 %v1038
    %v1277 = vunpack.c.h.b16 %v1038
    %v1278 = vunpack.c.l.b16 %v1039
    %v1279 = vunpack.c.l.b16 %v1040
    %v1280 = vunpack.c.h.b16 %v1040
    %v1281 = vunpack.c.l.b16 %v1041
    %v1282 = vunpack.c.l.b16 %v1042
    %v1283 = vunpack.c.h.b16 %v1042
    %v1284 = vunpack.c.l.b16 %v1043
    %v1285 = vunpack.c.l.b16 %v1044
    %v1286 = vunpack.c.h.b16 %v1044
    %v1287 = vunpack.c.l.b16 %v1045
    %v1288 = vunpack.c.l.b16 %v1046
    %v1289 = vunpack.c.h.b16 %v1046
    %v1290 = vunpack.c.l.b16 %v1047
    %v1291 = vunpack.c.l.b16 %v1048
    %v1292 = vunpack.c.h.b16 %v1048
    %v1293 = vunpack.c.l.b16 %v1049
    %v1294 = vunpack.c.l.b16 %v1050
    %v1295 = vunpack.c.h.b16 %v1050
    %v1296 = vunpack.c.l.b16 %v1051
    %v1297 = vunpack.c.l.b16 %v1052
    %v1298 = vunpack.c.h.b16 %v1052
    %v1299 = vunpack.c.l.b16 %v1053
    %v1300 = vunpack.c.l.b16 %v1054
    %v1301 = vunpack.c.h.b16 %v1054
    %v1302 = vunpack.c.l.b16 %v1055
    %v1303 = vunpack.c.l.b16 %v1056
    %v1304 = vunpack.c.h.b16 %v1056
    %v1305 = vunpack.c.l.b16 %v1057
    %v1306 = vunpack.c.l.b16 %v1058
    %v1307 = vunpack.c.h.b16 %v1058
    %v1308 = vunpack.c.l.b16 %v1059
    %v1309 = vunpack.c.l.b16 %v1060
    %v1310 = vunpack.c.h.b16 %v1060
    %v1311 = vunpack.c.l.b16 %v1061
    %v1312 = vunpack.c.l.b16 %v1062
    %v1313 = vunpack.c.h.b16 %v1062
    %v1314 = vunpack.c.l.b16 %v1063
    %v1315 = vunpack.c.l.b16 %v1064
    %v1316 = vunpack.c.h.b16 %v1064
    %v1317 = vunpack.c.l.b16 %v1065
    %v1318 = vunpack.c.l.b16 %v1066
    %v1319 = vunpack.c.h.b16 %v1066
    %v1320 = vunpack.c.l.b16 %v1067
    %v1321 = vunpack.c.l.b16 %v1068
    %v1322 = vunpack.c.h.b16 %v1068
    %v1323 = vunpack.c.l.b16 %v1069
    %v1324 = vunpack.c.l.b16 %v1070
    %v1325 = vunpack.c.h.b16 %v1070
    %v1326 = vunpack.c.l.b16 %v1071
    %v1327 = vunpack.c.l.b16 %v1072
    %v1328 = vunpack.c.h.b16 %v1072
    %v1329 = vunpack.c.l.b16 %v1073
    %v1330 = vunpack.c.l.b16 %v1074
    %v1331 = vunpack.c.h.b16 %v1074
    %v1332 = vunpack.c.l.b16 %v1075
    %v1333 = vunpack.c.l.b16 %v1076
    %v1334 = vunpack.c.h.b16 %v1076
    %v1335 = vunpack.c.l.b16 %v1077
    %v1336 = vunpack.c.l.b16 %v1078
    %v1337 = vunpack.c.h.b16 %v1078
    %v1338 = vunpack.c.l.b16 %v1079
    %v1339 = vunpack.c.l.b16 %v1080
    %v1340 = vunpack.c.h.b16 %v1080
    %v1341 = vunpack.c.l.b16 %v1081
    %v1342 = vunpack.c.l.b16 %v1082
    %v1343 = vunpack.c.h.b16 %v1082
    %v1344 = vunpack.c.l.b16 %v1083
    %v1345 = vunpack.c.l.b16 %v1084
    %v1346 = vunpack.c.h.b16 %v1084
    %v1347 = vunpack.c.l.b16 %v1085
    %v1348 = vunpack.c.l.b16 %v1086
    %v1349 = vunpack.c.h.b16 %v1086
    %v1350 = vunpack.c.l.b16 %v1087
    %v1351 = vunpack.c.l.b16 %v1088
    %v1352 = vunpack.c.h.b16 %v1088
    %v1353 = vunpack.c.l.b16 %v1089
    %v1354 = vunpack.c.l.b16 %v1090
    %v1355 = vunpack.c.h.b16 %v1090
    %v1356 = vunpack.c.l.b16 %v1091
    %v1357 = vunpack.c.l.b16 %v1092
    %v1358 = vunpack.c.h.b16 %v1092
    %v1359 = vunpack.c.l.b16 %v1093
    %v1360 = vunpack.c.l.b16 %v1094
    %v1361 = vunpack.c.h.b16 %v1094
    %v1362 = vunpack.c.l.b16 %v1095
    %v1363 = vpack.c.b16 %v1222, %v1219
    %v1364 = vpack.c.b16 %v1223, %v1220
    %v1365 = vpack.c.b16 %v1224, %v1221
    %v1366 = vpack.c.b16 %v1228, %v1225
    %v1367 = vpack.c.b16 %v1229, %v1226
    %v1368 = vpack.c.b16 %v1230, %v1227
    %v1369 = vpack.c.b16 %v1234, %v1231
    %v1370 = vpack.c.b16 %v1235, %v1232
    %v1371 = vpack.c.b16 %v1236, %v1233
    %v1372 = vpack.c.b16 %v1240, %v1237
    %v1373 = vpack.c.b16 %v1241, %v1238
    %v1374 = vpack.c.b16 %v1242, %v1239
    %v1375 = vpack.c.b16 %v1246, %v1243
    %v1376 = vpack.c.b16 %v1247, %v1244
    %v1377 = vpack.c.b16 %v1248, %v1245
    %v1378 = vpack.c.b16 %v1252, %v1249
    %v1379 = vpack.c.b16 %v1253, %v1250
    %v1380 = vpack.c.b16 %v1254, %v1251
    %v1381 = vpack.c.b16 %v1258, %v1255
    %v1382 = vpack.c.b16 %v1259, %v1256
    %v1383 = vpack.c.b16 %v1260, %v1257
    %v1384 = vpack.c.b16 %v1264, %v1261
    %v1385 = vpack.c.b16 %v1265, %v1262
    %v1386 = vpack.c.b16 %v1266, %v1263
    %v1387 = vpack.c.b16 %v1270, %v1267
    %v1388 = vpack.c.b16 %v1271, %v1268
    %v1389 = vpack.c.b16 %v1272, %v1269
    %v1390 = vpack.c.b16 %v1276, %v1273
    %v1391 = vpack.c.b16 %v1277, %v1274
    %v1392 = vpack.c.b16 %v1278, %v1275
    %v1393 = vpack.c.b16 %v1282, %v1279
    %v1394 = vpack.c.b16 %v1283, %v1280
    %v1395 = vpack.c.b16 %v1284, %v1281
    %v1396 = vpack.c.b16 %v1288, %v1285
    %v1397 = vpack.c.b16 %v1289, %v1286
    %v1398 = vpack.c.b16 %v1290, %v1287
    %v1399 = vpack.c.b16 %v1294, %v1291
    %v1400 = vpack.c.b16 %v1295, %v1292
    %v1401 = vpack.c.b16 %v1296, %v1293
    %v1402 = vpack.c.b16 %v1300, %v1297
    %v1403 = vpack.c.b16 %v1301, %v1298
    %v1404 = vpack.c.b16 %v1302, %v1299
    %v1405 = vpack.c.b16 %v1306, %v1303
    %v1406 = vpack.c.b16 %v1307, %v1304
    %v1407 = vpack.c.b16 %v1308, %v1305
    %v1408 = vpack.c.b16 %v1312, %v1309
    %v1409 = vpack.c.b16 %v1313, %v1310
    %v1410 = vpack.c.b16 %v1314, %v1311
    %v1411 = vpack.c.b16 %v1318, %v1315
    %v1412 = vpack.c.b16 %v1319, %v1316
    %v1413 = vpack.c.b16 %v1320, %v1317
    %v1414 = vpack.c.b16 %v1324, %v1321
    %v1415 = vpack.c.b16 %v1325, %v1322
    %v1416 = vpack.c.b16 %v1326, %v1323
    %v1417 = vpack.c.b16 %v1330, %v1327
    %v1418 = vpack.c.b16 %v1331, %v1328
    %v1419 = vpack.c.b16 %v1332, %v1329
    %v1420 = vpack.c.b16 %v1336, %v1333
    %v1421 = vpack.c.b16 %v1337, %v1334
    %v1422 = vpack.c.b16 %v1338, %v1335
    %v1423 = vpack.c.b16 %v1342, %v1339
    %v1424 = vpack.c.b16 %v1343, %v1340
    %v1425 = vpack.c.b16 %v1344, %v1341
    %v1426 = vpack.c.b16 %v1348, %v1345
    %v1427 = vpack.c.b16 %v1349, %v1346
    %v1428 = vpack.c.b16 %v1350, %v1347
    %v1429 = vpack.c.b16 %v1354, %v1351
    %v1430 = vpack.c.b16 %v1355, %v1352
    %v1431 = vpack.c.b16 %v1356, %v1353
    %v1432 = vpack.c.b16 %v1360, %v1357
    %v1433 = vpack.c.b16 %v1361, %v1358
    %v1434 = vpack.c.b16 %v1362, %v1359
    %1507 = vmatprep.subr.bf16.mxu0 %v1364
    %1508 = vmatpush1.bf16.msra.mxu0 %v1363
    %1509 = vmatprep.subr.bf16.mxu0 %v1367
    %1510 = vmatpush1.bf16.msra.mxu0 %v1366
    %1511 = vmatprep.subr.bf16.mxu0 %v1370
    %1512 = vmatpush1.bf16.msra.mxu0 %v1369
    %1513 = vmatprep.subr.bf16.mxu0 %v1373
    %1514 = vmatpush1.bf16.msra.mxu0 %v1372
    %1515 = vmatprep.subr.bf16.mxu0 %v1376
    %1516 = vmatpush1.bf16.msra.mxu0 %v1375
    %1517 = vmatprep.subr.bf16.mxu0 %v1379
    %1518 = vmatpush1.bf16.msra.mxu0 %v1378
    %1519 = vmatprep.subr.bf16.mxu0 %v1382
    %1520 = vmatpush1.bf16.msra.mxu0 %v1381
    %1521 = vmatprep.subr.bf16.mxu0 %v1385
    %1522 = vmatpush1.bf16.msra.mxu0 %v1384
    %1523 = vmatprep.subr.bf16.mxu0 %v1388
    %1524 = vmatpush1.bf16.msra.mxu0 %v1387
    %1525 = vmatprep.subr.bf16.mxu0 %v1391
    %1526 = vmatpush1.bf16.msra.mxu0 %v1390
    %1527 = vmatprep.subr.bf16.mxu0 %v1394
    %1528 = vmatpush1.bf16.msra.mxu0 %v1393
    %1529 = vmatprep.subr.bf16.mxu0 %v1397
    %1530 = vmatpush1.bf16.msra.mxu0 %v1396
    %1531 = vmatprep.subr.bf16.mxu0 %v1400
    %1532 = vmatpush1.bf16.msra.mxu0 %v1399
    %1533 = vmatprep.subr.bf16.mxu0 %v1403
    %1534 = vmatpush1.bf16.msra.mxu0 %v1402
    %1535 = vmatprep.subr.bf16.mxu0 %v1406
    %1536 = vmatpush1.bf16.msra.mxu0 %v1405
    %1537 = vmatprep.subr.bf16.mxu0 %v1409
    %1538 = vmatpush1.bf16.msra.mxu0 %v1408
    %1539 = vmatprep.mubr.bf16.mxu0 %v998
    %1540 = vmatmul.mubr.bf16.gmra.mrb[0].mxu0 %v997
    %v1541 = vpop.f32.mrb[0].mxu0
    %v1542 = vadd.f32 %v1114, %v1541
    %v1543 = vpop.f32.mrb[0].mxu0
    %v1544 = vadd.f32 %v1118, %v1543
    %v1545 = vpop.f32.mrb[0].mxu0
    %v1546 = vadd.f32 %v1114, %v1545
    %v1547 = vpop.f32.mrb[0].mxu0
    %v1548 = vadd.f32 %v1118, %v1547
    %1549 = vdwg.mxu0
    %1550 = vmatprep.subr.bf16.mxu0 %v1412
    %1551 = vmatpush1.bf16.msra.mxu0 %v1411
    %1552 = vmatprep.subr.bf16.mxu0 %v1415
    %1553 = vmatpush1.bf16.msra.mxu0 %v1414
    %1554 = vmatprep.subr.bf16.mxu0 %v1418
    %1555 = vmatpush1.bf16.msra.mxu0 %v1417
    %1556 = vmatprep.subr.bf16.mxu0 %v1421
    %1557 = vmatpush1.bf16.msra.mxu0 %v1420
    %1558 = vmatprep.subr.bf16.mxu0 %v1424
    %1559 = vmatpush1.bf16.msra.mxu0 %v1423
    %1560 = vmatprep.subr.bf16.mxu0 %v1427
    %1561 = vmatpush1.bf16.msra.mxu0 %v1426
    %1562 = vmatprep.subr.bf16.mxu0 %v1430
    %1563 = vmatpush1.bf16.msra.mxu0 %v1429
    %1564 = vmatprep.subr.bf16.mxu0 %v1433
    %1565 = vmatpush1.bf16.msra.mxu0 %v1432
    %1566 = vmatprep.subr.bf16.mxu0 0
    %1567 = vmatpush1.bf16.msra.mxu0 0
    %1568 = vmatprep.subr.bf16.mxu0 0
    %1569 = vmatpush1.bf16.msra.mxu0 0
    %1570 = vmatprep.subr.bf16.mxu0 0
    %1571 = vmatpush1.bf16.msra.mxu0 0
    %1572 = vmatprep.subr.bf16.mxu0 0
    %1573 = vmatpush1.bf16.msra.mxu0 0
    %1574 = vmatprep.subr.bf16.mxu0 0
    %1575 = vmatpush1.bf16.msra.mxu0 0
    %1576 = vmatprep.subr.bf16.mxu0 0
    %1577 = vmatpush1.bf16.msra.mxu0 0
    %1578 = vmatprep.subr.bf16.mxu0 0
    %1579 = vmatpush1.bf16.msra.mxu0 0
    %1580 = vmatprep.subr.bf16.mxu0 0
    %1581 = vmatpush1.bf16.msra.mxu0 0
    %1582 = vmatprep.mubr.bf16.mxu0 0
    %1583 = vmatmul.mubr.bf16.gmra.mrb[0].mxu0 %v999
    %v1584 = vpop.f32.mrb[0].mxu0
    %v1585 = vadd.f32 %v1542, %v1584
    %v1586 = vpop.f32.mrb[0].mxu0
    %v1587 = vadd.f32 %v1544, %v1586
    %v1588 = vpop.f32.mrb[0].mxu0
    %v1589 = vadd.f32 %v1546, %v1588
    %v1590 = vpop.f32.mrb[0].mxu0
    %v1591 = vadd.f32 %v1548, %v1590
    %1592 = vdwg.mxu0
    %1593 = vmatprep.subr.bf16.mxu0 0
    %1594 = vmatpush1.bf16.msra.mxu0 %v1365
    %1595 = vmatprep.subr.bf16.mxu0 0
    %1596 = vmatpush1.bf16.msra.mxu0 %v1368
    %1597 = vmatprep.subr.bf16.mxu0 0
    %1598 = vmatpush1.bf16.msra.mxu0 %v1371
    %1599 = vmatprep.subr.bf16.mxu0 0
    %1600 = vmatpush1.bf16.msra.mxu0 %v1374
    %1601 = vmatprep.subr.bf16.mxu0 0
    %1602 = vmatpush1.bf16.msra.mxu0 %v1377
    %1603 = vmatprep.subr.bf16.mxu0 0
    %1604 = vmatpush1.bf16.msra.mxu0 %v1380
    %1605 = vmatprep.subr.bf16.mxu0 0
    %1606 = vmatpush1.bf16.msra.mxu0 %v1383
    %1607 = vmatprep.subr.bf16.mxu0 0
    %1608 = vmatpush1.bf16.msra.mxu0 %v1386
    %1609 = vmatprep.subr.bf16.mxu0 0
    %1610 = vmatpush1.bf16.msra.mxu0 %v1389
    %1611 = vmatprep.subr.bf16.mxu0 0
    %1612 = vmatpush1.bf16.msra.mxu0 %v1392
    %1613 = vmatprep.subr.bf16.mxu0 0
    %1614 = vmatpush1.bf16.msra.mxu0 %v1395
    %1615 = vmatprep.subr.bf16.mxu0 0
    %1616 = vmatpush1.bf16.msra.mxu0 %v1398
    %1617 = vmatprep.subr.bf16.mxu0 0
    %1618 = vmatpush1.bf16.msra.mxu0 %v1401
    %1619 = vmatprep.subr.bf16.mxu0 0
    %1620 = vmatpush1.bf16.msra.mxu0 %v1404
    %1621 = vmatprep.subr.bf16.mxu0 0
    %1622 = vmatpush1.bf16.msra.mxu0 %v1407
    %1623 = vmatprep.subr.bf16.mxu0 0
    %1624 = vmatpush1.bf16.msra.mxu0 %v1410
    %1625 = vmatprep.mubr.bf16.mxu0 %v998
    %1626 = vmatmul.mubr.bf16.gmra.mrb[0].mxu0 %v997
    %v1627 = vpop.f32.mrb[0].mxu0
    %v1628 = vadd.f32 %v1122, %v1627
    %v1629 = vpop.f32.mrb[0].mxu0
    %v1630 = vpop.f32.mrb[0].mxu0
    %v1631 = vadd.f32 %v1122, %v1630
    %v1632 = vpop.f32.mrb[0].mxu0
    %1633 = vdwg.mxu0
    %1634 = vmatprep.subr.bf16.mxu0 0
    %1635 = vmatpush1.bf16.msra.mxu0 %v1413
    %1636 = vmatprep.subr.bf16.mxu0 0
    %1637 = vmatpush1.bf16.msra.mxu0 %v1416
    %1638 = vmatprep.subr.bf16.mxu0 0
    %1639 = vmatpush1.bf16.msra.mxu0 %v1419
    %1640 = vmatprep.subr.bf16.mxu0 0
    %1641 = vmatpush1.bf16.msra.mxu0 %v1422
    %1642 = vmatprep.subr.bf16.mxu0 0
    %1643 = vmatpush1.bf16.msra.mxu0 %v1425
    %1644 = vmatprep.subr.bf16.mxu0 0
    %1645 = vmatpush1.bf16.msra.mxu0 %v1428
    %1646 = vmatprep.subr.bf16.mxu0 0
    %1647 = vmatpush1.bf16.msra.mxu0 %v1431
    %1648 = vmatprep.subr.bf16.mxu0 0
    %1649 = vmatpush1.bf16.msra.mxu0 %v1434
    %1650 = vmatprep.subr.bf16.mxu0 0
    %1651 = vmatpush1.bf16.msra.mxu0 0
    %1652 = vmatprep.subr.bf16.mxu0 0
    %1653 = vmatpush1.bf16.msra.mxu0 0
    %1654 = vmatprep.subr.bf16.mxu0 0
    %1655 = vmatpush1.bf16.msra.mxu0 0
    %1656 = vmatprep.subr.bf16.mxu0 0
    %1657 = vmatpush1.bf16.msra.mxu0 0
    %1658 = vmatprep.subr.bf16.mxu0 0
    %1659 = vmatpush1.bf16.msra.mxu0 0
    %1660 = vmatprep.subr.bf16.mxu0 0
    %1661 = vmatpush1.bf16.msra.mxu0 0
    %1662 = vmatprep.subr.bf16.mxu0 0
    %1663 = vmatpush1.bf16.msra.mxu0 0
    %1664 = vmatprep.subr.bf16.mxu0 0
    %1665 = vmatpush1.bf16.msra.mxu0 0
    %1666 = vmatprep.mubr.bf16.mxu0 0
    %1667 = vmatmul.mubr.bf16.gmra.mrb[0].mxu0 %v999
    %v1668 = vpop.f32.mrb[0].mxu0
    %v1669 = vadd.f32 %v1628, %v1668
    %v1670 = vpop.f32.mrb[0].mxu0
    %v1671 = vpop.f32.mrb[0].mxu0
    %v1672 = vadd.f32 %v1631, %v1671
    %v1673 = vpop.f32.mrb[0].mxu0
    %1674 = vdwg.mxu0
    %v1675 = vmax.f32 %v1585, 0.0
    %v1676 = vmax.f32 %v1587, 0.0
    %v1677 = vmax.f32 %v1669, 0.0
    %v1678 = vmax.f32 %v1589, 0.0
    %v1679 = vmax.f32 %v1591, 0.0
    %v1680 = vmax.f32 %v1672, 0.0
    %v1681 = vpack.c.bf16 %v1678, %v1675
    %v1682 = vpack.c.bf16 %v1679, %v1676
    %v1683 = vpack.c.bf16 %v1680, %v1677
    %v1684 = vld [vmem:[#allocation10] sm:$0xf]
    %v1685 = vld [vmem:[#allocation10 + $0x4] sm:$0xf]
    %v1686 = vld [vmem:[#allocation10 + $0x8] sm:$0xf]
    %v1687 = vld [vmem:[#allocation10 + $0xc] sm:$0xf]
    %v1688 = vld [vmem:[#allocation10 + $0x10] sm:$0xf]
    %v1689 = vld [vmem:[#allocation10 + $0x14] sm:$0xf]
    %v1690 = vld [vmem:[#allocation10 + $0x18] sm:$0xf]
    %v1691 = vld [vmem:[#allocation10 + $0x1c] sm:$0xf]
    %v1692 = vld [vmem:[#allocation10 + $0x20] sm:$0xf]
    %v1693 = vld [vmem:[#allocation10 + $0x24] sm:$0xf]
    %v1694 = vld [vmem:[#allocation10 + $0x28] sm:$0xf]
    %v1695 = vld [vmem:[#allocation10 + $0x2c] sm:$0xf]
    %v1696 = vld [vmem:[#allocation10 + $0x30] sm:$0xf]
    %v1697 = vld [vmem:[#allocation10 + $0x34] sm:$0xf]
    %v1698 = vld [vmem:[#allocation10 + $0x38] sm:$0xf]
    %v1699 = vld [vmem:[#allocation10 + $0x3c] sm:$0xf]
    %v1700 = vld [vmem:[#allocation10 + $0x40] sm:$0xf]
    %v1701 = vld [vmem:[#allocation10 + $0x44] sm:$0xf]
    %v1702 = vld [vmem:[#allocation10 + $0x48] sm:$0xf]
    %v1703 = vld [vmem:[#allocation10 + $0x4c] sm:$0xf]
    %v1704 = vld [vmem:[#allocation10 + $0x50] sm:$0xf]
    %v1705 = vld [vmem:[#allocation10 + $0x54] sm:$0xf]
    %v1706 = vld [vmem:[#allocation10 + $0x58] sm:$0xf]
    %v1707 = vld [vmem:[#allocation10 + $0x5c] sm:$0xf]
    %v1708 = vld [vmem:[#allocation10 + $0x60] sm:$0xf]
    %v1709 = vld [vmem:[#allocation10 + $0x64] sm:$0xf]
    %v1710 = vld [vmem:[#allocation10 + $0x68] sm:$0xf]
    %v1711 = vld [vmem:[#allocation10 + $0x6c] sm:$0xf]
    %v1712 = vld [vmem:[#allocation10 + $0x70] sm:$0xf]
    %v1713 = vld [vmem:[#allocation10 + $0x74] sm:$0xf]
    %v1714 = vld [vmem:[#allocation10 + $0x78] sm:$0xf]
    %v1715 = vld [vmem:[#allocation10 + $0x7c] sm:$0xf]
    %v1716 = vld [vmem:[#allocation10 + $0x80] sm:$0xf]
    %v1717 = vld [vmem:[#allocation10 + $0x84] sm:$0xf]
    %v1718 = vld [vmem:[#allocation10 + $0x88] sm:$0xf]
    %v1719 = vld [vmem:[#allocation10 + $0x8c] sm:$0xf]
    %v1720 = vld [vmem:[#allocation10 + $0x90] sm:$0xf]
    %v1721 = vld [vmem:[#allocation10 + $0x94] sm:$0xf]
    %v1722 = vld [vmem:[#allocation10 + $0x98] sm:$0xf]
    %v1723 = vld [vmem:[#allocation10 + $0x9c] sm:$0xf]
    %v1724 = vld [vmem:[#allocation10 + $0xa0] sm:$0xf]
    %v1725 = vld [vmem:[#allocation10 + $0xa4] sm:$0xf]
    %v1726 = vld [vmem:[#allocation10 + $0xa8] sm:$0xf]
    %v1727 = vld [vmem:[#allocation10 + $0xac] sm:$0xf]
    %v1728 = vld [vmem:[#allocation10 + $0xb0] sm:$0xf]
    %v1729 = vld [vmem:[#allocation10 + $0xb4] sm:$0xf]
    %v1730 = vld [vmem:[#allocation10 + $0xb8] sm:$0xf]
    %v1731 = vld [vmem:[#allocation10 + $0xbc] sm:$0xf]
    %v1732 = vlaneseq
    %v1733 = vshrl.u32 %v1732, 7
    %v1734 = vsub.s32 3, %v1733
    %v1735 = vrot.slane %v105, %v1734
    %v1784 = vunpack.c.l.b16 %v1684
    %v1785 = vunpack.c.l.b16 %v1685
    %v1786 = vunpack.c.l.b16 %v1686
    %v1787 = vunpack.c.l.b16 %v1687
    %v1788 = vunpack.c.l.b16 %v1688
    %v1789 = vunpack.c.l.b16 %v1689
    %v1790 = vunpack.c.l.b16 %v1690
    %v1791 = vunpack.c.l.b16 %v1691
    %v1792 = vunpack.c.l.b16 %v1692
    %v1793 = vunpack.c.l.b16 %v1693
    %v1794 = vunpack.c.l.b16 %v1694
    %v1795 = vunpack.c.l.b16 %v1695
    %v1796 = vunpack.c.l.b16 %v1696
    %v1797 = vunpack.c.l.b16 %v1697
    %v1798 = vunpack.c.l.b16 %v1698
    %v1799 = vunpack.c.l.b16 %v1699
    %v1800 = vunpack.c.l.b16 %v1700
    %v1801 = vunpack.c.l.b16 %v1701
    %v1802 = vunpack.c.l.b16 %v1702
    %v1803 = vunpack.c.l.b16 %v1703
    %v1804 = vunpack.c.l.b16 %v1704
    %v1805 = vunpack.c.l.b16 %v1705
    %v1806 = vunpack.c.l.b16 %v1706
    %v1807 = vunpack.c.l.b16 %v1707
    %v1808 = vunpack.c.l.b16 %v1708
    %v1809 = vunpack.c.l.b16 %v1709
    %v1810 = vunpack.c.l.b16 %v1710
    %v1811 = vunpack.c.l.b16 %v1711
    %v1812 = vunpack.c.l.b16 %v1712
    %v1813 = vunpack.c.l.b16 %v1713
    %v1814 = vunpack.c.l.b16 %v1714
    %v1815 = vunpack.c.l.b16 %v1715
    %v1816 = vunpack.c.l.b16 %v1716
    %v1817 = vunpack.c.l.b16 %v1717
    %v1818 = vunpack.c.l.b16 %v1718
    %v1819 = vunpack.c.l.b16 %v1719
    %v1820 = vunpack.c.l.b16 %v1720
    %v1821 = vunpack.c.l.b16 %v1721
    %v1822 = vunpack.c.l.b16 %v1722
    %v1823 = vunpack.c.l.b16 %v1723
    %v1824 = vunpack.c.l.b16 %v1724
    %v1825 = vunpack.c.l.b16 %v1725
    %v1826 = vunpack.c.l.b16 %v1726
    %v1827 = vunpack.c.l.b16 %v1727
    %v1828 = vunpack.c.l.b16 %v1728
    %v1829 = vunpack.c.l.b16 %v1729
    %v1830 = vunpack.c.l.b16 %v1730
    %v1831 = vunpack.c.l.b16 %v1731
    %v1832 = vpack.c.b16 %v1785, %v1784
    %v1833 = vpack.c.b16 %v1787, %v1786
    %v1834 = vpack.c.b16 %v1789, %v1788
    %v1835 = vpack.c.b16 %v1791, %v1790
    %v1836 = vpack.c.b16 %v1793, %v1792
    %v1837 = vpack.c.b16 %v1795, %v1794
    %v1838 = vpack.c.b16 %v1797, %v1796
    %v1839 = vpack.c.b16 %v1799, %v1798
    %v1840 = vpack.c.b16 %v1801, %v1800
    %v1841 = vpack.c.b16 %v1803, %v1802
    %v1842 = vpack.c.b16 %v1805, %v1804
    %v1843 = vpack.c.b16 %v1807, %v1806
    %v1844 = vpack.c.b16 %v1809, %v1808
    %v1845 = vpack.c.b16 %v1811, %v1810
    %v1846 = vpack.c.b16 %v1813, %v1812
    %v1847 = vpack.c.b16 %v1815, %v1814
    %v1848 = vpack.c.b16 %v1817, %v1816
    %v1849 = vpack.c.b16 %v1819, %v1818
    %v1850 = vpack.c.b16 %v1821, %v1820
    %v1851 = vpack.c.b16 %v1823, %v1822
    %v1852 = vpack.c.b16 %v1825, %v1824
    %v1853 = vpack.c.b16 %v1827, %v1826
    %v1854 = vpack.c.b16 %v1829, %v1828
    %v1855 = vpack.c.b16 %v1831, %v1830
    %1880 = vmatprep.subr.bf16.mxu0 0
    %1881 = vmatpush1.bf16.msra.mxu0 %v1832
    %1882 = vmatprep.subr.bf16.mxu0 0
    %1883 = vmatpush1.bf16.msra.mxu0 %v1833
    %1884 = vmatprep.subr.bf16.mxu0 0
    %1885 = vmatpush1.bf16.msra.mxu0 %v1834
    %1886 = vmatprep.subr.bf16.mxu0 0
    %1887 = vmatpush1.bf16.msra.mxu0 %v1835
    %1888 = vmatprep.subr.bf16.mxu0 0
    %1889 = vmatpush1.bf16.msra.mxu0 %v1836
    %1890 = vmatprep.subr.bf16.mxu0 0
    %1891 = vmatpush1.bf16.msra.mxu0 %v1837
    %1892 = vmatprep.subr.bf16.mxu0 0
    %1893 = vmatpush1.bf16.msra.mxu0 %v1838
    %1894 = vmatprep.subr.bf16.mxu0 0
    %1895 = vmatpush1.bf16.msra.mxu0 %v1839
    %1896 = vmatprep.subr.bf16.mxu0 0
    %1897 = vmatpush1.bf16.msra.mxu0 %v1840
    %1898 = vmatprep.subr.bf16.mxu0 0
    %1899 = vmatpush1.bf16.msra.mxu0 %v1841
    %1900 = vmatprep.subr.bf16.mxu0 0
    %1901 = vmatpush1.bf16.msra.mxu0 %v1842
    %1902 = vmatprep.subr.bf16.mxu0 0
    %1903 = vmatpush1.bf16.msra.mxu0 %v1843
    %1904 = vmatprep.subr.bf16.mxu0 0
    %1905 = vmatpush1.bf16.msra.mxu0 %v1844
    %1906 = vmatprep.subr.bf16.mxu0 0
    %1907 = vmatpush1.bf16.msra.mxu0 %v1845
    %1908 = vmatprep.subr.bf16.mxu0 0
    %1909 = vmatpush1.bf16.msra.mxu0 %v1846
    %1910 = vmatprep.subr.bf16.mxu0 0
    %1911 = vmatpush1.bf16.msra.mxu0 %v1847
    %1912 = vmatprep.mubr.bf16.mxu0 %v1682
    %1913 = vmatmul.mubr.bf16.gmra.mrb[0].mxu0 %v1681
    %v1914 = vpop.f32.mrb[0].mxu0
    %v1915 = vadd.f32 %v1735, %v1914
    %v1916 = vpop.f32.mrb[0].mxu0
    %v1917 = vpop.f32.mrb[0].mxu0
    %v1918 = vadd.f32 %v1735, %v1917
    %v1919 = vpop.f32.mrb[0].mxu0
    %1920 = vdwg.mxu0
    %1921 = vmatprep.subr.bf16.mxu0 0
    %1922 = vmatpush1.bf16.msra.mxu0 %v1848
    %1923 = vmatprep.subr.bf16.mxu0 0
    %1924 = vmatpush1.bf16.msra.mxu0 %v1849
    %1925 = vmatprep.subr.bf16.mxu0 0
    %1926 = vmatpush1.bf16.msra.mxu0 %v1850
    %1927 = vmatprep.subr.bf16.mxu0 0
    %1928 = vmatpush1.bf16.msra.mxu0 %v1851
    %1929 = vmatprep.subr.bf16.mxu0 0
    %1930 = vmatpush1.bf16.msra.mxu0 %v1852
    %1931 = vmatprep.subr.bf16.mxu0 0
    %1932 = vmatpush1.bf16.msra.mxu0 %v1853
    %1933 = vmatprep.subr.bf16.mxu0 0
    %1934 = vmatpush1.bf16.msra.mxu0 %v1854
    %1935 = vmatprep.subr.bf16.mxu0 0
    %1936 = vmatpush1.bf16.msra.mxu0 %v1855
    %1937 = vmatprep.subr.bf16.mxu0 0
    %1938 = vmatpush1.bf16.msra.mxu0 0
    %1939 = vmatprep.subr.bf16.mxu0 0
    %1940 = vmatpush1.bf16.msra.mxu0 0
    %1941 = vmatprep.subr.bf16.mxu0 0
    %1942 = vmatpush1.bf16.msra.mxu0 0
    %1943 = vmatprep.subr.bf16.mxu0 0
    %1944 = vmatpush1.bf16.msra.mxu0 0
    %1945 = vmatprep.subr.bf16.mxu0 0
    %1946 = vmatpush1.bf16.msra.mxu0 0
    %1947 = vmatprep.subr.bf16.mxu0 0
    %1948 = vmatpush1.bf16.msra.mxu0 0
    %1949 = vmatprep.subr.bf16.mxu0 0
    %1950 = vmatpush1.bf16.msra.mxu0 0
    %1951 = vmatprep.subr.bf16.mxu0 0
    %1952 = vmatpush1.bf16.msra.mxu0 0
    %1953 = vmatprep.mubr.bf16.mxu0 0
    %1954 = vmatmul.mubr.bf16.gmra.mrb[0].mxu0 %v1683
    %v1955 = vpop.f32.mrb[0].mxu0
    %v1956 = vadd.f32 %v1915, %v1955
    %v1957 = vpop.f32.mrb[0].mxu0
    %v1958 = vpop.f32.mrb[0].mxu0
    %v1959 = vadd.f32 %v1918, %v1958
    %v1960 = vpop.f32.mrb[0].mxu0
    %1961 = vdwg.mxu0
    %1962 = vst [vmem:[#allocation13] sm:$0xff] %v1956
    %1963 = vst [vmem:[#allocation13 + $0x8] sm:$0xff] %v1959
    // Predicated region
    $region50: #{ffnet_forward.1} parent=1 // pred_check
      _
    $region51: #{ffnet_forward.1} parent=1 // pred_check_branch
      %1965 = sbr.rel (0) target = $region53
    $region52: #{ffnet_forward.1} parent=1 // pred_region
      %s1967 = ssub.s32 256, 256
      %1968 = vsyncadd [#allocation4], %s1967
      %s1969 = sshll.u32 [#allocation13], 4
      %s1970 = int_to_ptr.vmem [resolvable:$true] %s1969
      %1975 = dma.vmem_to_hbm [thread:$0]  %s1970, 256, %s6, [#allocation4], 128, 128, 8
    $region53: #{ffnet_forward.1} parent=1 // pred_fallthru
      _
    // Predicated region
    $region54: #{ffnet_forward.1} parent=1 // pred_check
      _
    $region55: #{ffnet_forward.1} parent=1 // pred_check_branch
      %1977 = sbr.rel (0) target = $region57
    $region56: #{ffnet_forward.1} parent=1 // pred_region
      %1978 = dma.done [#allocation4], 256
    $region57: #{ffnet_forward.1} parent=1 // pred_fallthru
      _
    %1979 = vsyncpa [#allocation3], 1
    %1980 = vsyncpa [#allocation6], 1
    %1981 = vsyncpa [#allocation9], 1
    %1982 = vsyncpa [#allocation12], 1
    %1983 = vsyncpa [#allocation4], 1

</llo_original>
